<compile_context>
chip_gen: v7x
topology: tpu7x:2x2x1
jax: 0.10.0
libtpu: 0.0.40
codegen_flags: <defaults>
</compile_context>

<pallas_src>
import functools

import jax
import jax.numpy as jnp
from jax.experimental import pallas as pl
from jax.experimental.pallas import tpu as pltpu


def _sep_conv_kernel(xa_ref, xh_ref, wf_ref, shift_ref, o_ref, col_ref, *,
                     chunk_rows, approx_swish):
    """One (batch, row-strip) tile per grid step.

    xa_ref   : (1, TH, W+2, Cin)   padded input rows [i*TH, i*TH+TH)
    xh_ref   : (1, 2, W+2, Cin)    halo rows [i*TH+TH, i*TH+TH+2)
    wf_ref   : (9*Cin, Cout)       fused depthwise*pointwise*BN weights
    shift_ref: (1, Cout)           (bias - running_mean) * scale + beta
    o_ref    : (1, TH, W, Cout)
    col_ref  : (TH*W, 9*Cin)       im2col scratch in the MXU feed dtype
    """
    TH, W, Cout = o_ref.shape[1], o_ref.shape[2], o_ref.shape[3]
    Cin = xa_ref.shape[3]
    cdt = col_ref.dtype

    # im2col: write the 9 shifted taps straight into scratch (cast to the MXU
    # feed dtype on the way).  Output row h uses padded rows h..h+2; rows that
    # fall past the main strip come from the 2-row halo block.
    xh = xh_ref[0].astype(cdt)                                   # (2, W+2, Cin)
    for kh in range(3):
        for kw in range(3):
            k = kh * 3 + kw
            main = xa_ref[0, kh:TH, kw:kw + W, :].astype(cdt)    # (TH-kh, W, Cin)
            col_ref[0:(TH - kh) * W, k * Cin:(k + 1) * Cin] = (
                main.reshape((TH - kh) * W, Cin))
            if kh > 0:
                col_ref[(TH - kh) * W:TH * W, k * Cin:(k + 1) * Cin] = (
                    xh[0:kh, kw:kw + W, :].reshape(kh * W, Cin))

    # Fused depthwise+pointwise+BN as ONE MXU matmul (K = 9*Cin), chunked over
    # row sub-blocks so the f32 result + Swish temporaries stay small.
    shift = shift_ref[...].astype(jnp.float32)                   # (1, Cout)
    n_chunks = TH // chunk_rows
    for c in range(n_chunks):
        r0 = c * chunk_rows * W
        y = jnp.dot(col_ref[r0:r0 + chunk_rows * W, :], wf_ref[...],
                    preferred_element_type=jnp.float32)          # (chunk*W, Cout)
        y = y + shift
        if approx_swish:
            # exp and reciprocal both live in the (otherwise idle) EUP slot.
            y = y * pl.reciprocal(1.0 + jnp.exp(-y), approx=True)
        else:
            y = y * jax.nn.sigmoid(y)
        o_ref[0, c * chunk_rows:(c + 1) * chunk_rows, :, :] = (
            y.reshape(chunk_rows, W, Cout).astype(o_ref.dtype))
    # TODO(synk): lane-dense (W*Cout) output store / direct-NCHW emission would
    # cut masked stores when Cout < 128, at the cost of an in-kernel relayout.


def _vmem_limit_bytes():
    """Generation-gated scoped-VMEM limit (v7x: 64 MiB phys, v5e/v6e: 128 MiB)."""
    cap = 64 * 1024 * 1024
    try:
        info = pltpu.get_tpu_info()
        cap = int(getattr(info, "vmem_capacity_bytes", cap))
    except Exception:
        pass
    return max(16 * 1024 * 1024, min(int(cap * 0.75), 100 * 1024 * 1024))


def _pick_chunk_rows(th, W, target_pixels=1024):
    """Largest divisor of th with chunk_rows*W <= ~target_pixels output pixels."""
    target = max(1, target_pixels // W)
    best = 1
    for d in range(1, th + 1):
        if th % d == 0 and d <= target:
            best = d
    return best


def _pick_strip_height(N, H, W, Cin, Cout, in_bytes, out_bytes, cmp_bytes,
                       budget_bytes):
    """Largest EVEN divisor of H whose per-strip working set fits the budget.

    When N == 1, prefer >= 2 strips so both v7x TensorCores get work.
    """
    def footprint(th):
        blk_in = th * (W + 2) * Cin * in_bytes
        halo = 2 * (W + 2) * Cin * in_bytes
        blk_out = th * W * Cout * out_bytes
        weights = 9 * Cin * Cout * cmp_bytes + 4 * Cout
        col = th * W * 9 * Cin * cmp_bytes                       # im2col scratch
        ch = _pick_chunk_rows(th, W)
        temps = ch * W * (9 * Cin * cmp_bytes + 2 * 4 * Cout)    # lhs chunk + f32 result
        return 2 * (blk_in + halo + blk_out + weights) + col + temps  # 2x: dbl-buffer

    evens = [d for d in range(2, H + 1, 2) if H % d == 0]
    if not evens:
        raise ValueError(f"H={H} must be even (3x3 'same' halo block needs an "
                         "even strip height)")
    fitting = [d for d in sorted(evens, reverse=True) if footprint(d) <= budget_bytes]
    if not fitting:
        return min(evens)
    if N == 1:
        multi = [d for d in fitting if H // d >= 2]
        if multi:
            return multi[0]
    return fitting[0]


@functools.partial(jax.jit, static_argnames=("eps", "strip_h", "mxu_bf16"))
def separable_conv_block(x_nchw, w_dw, w_pw, b_pw, gamma, beta, run_mean,
                         run_var, *, eps=1e-3, strip_h=None, mxu_bf16=True):
    """SeparableConvBlock forward: depthwise 3x3 "same" -> pointwise 1x1 (+bias)
    -> BatchNorm (inference, running stats) -> Swish.  NCHW in / NCHW out."""
    N, Cin, H, W = x_nchw.shape
    Cout = w_pw.shape[0]
    cmp_dtype = jnp.bfloat16 if mxu_bf16 else jnp.float32
    cmp_bytes = 2 if mxu_bf16 else 4
    in_bytes = jnp.dtype(x_nchw.dtype).itemsize

    vmem_limit = _vmem_limit_bytes()
    if strip_h is None:
        TH = _pick_strip_height(N, H, W, Cin, Cout, in_bytes, in_bytes,
                                cmp_bytes, budget_bytes=int(0.8 * vmem_limit))
    else:
        TH = int(strip_h)
    if H % TH != 0 or TH % 2 != 0:
        raise ValueError(f"strip height {TH} must be even and divide H={H}")
    n_strips = H // TH
    chunk_rows = _pick_chunk_rows(TH, W)

    # NCHW -> NHWC + 1px zero halo (fuse under jit into one relayout copy).
    # TODO(synk): if the surrounding model can stay NHWC, take/return NHWC and
    # drop both bracketing transposes (they can rival the kernel's HBM traffic).
    x_nhwc = jnp.transpose(x_nchw, (0, 2, 3, 1))
    x_pad = jnp.pad(x_nhwc, ((0, 0), (1, 1), (1, 1), (0, 0)))

    # Fold depthwise, pointwise, bias and inference BatchNorm into one fused
    # (9*Cin, Cout) matmul weight and a single per-channel shift.
    scale = gamma / jnp.sqrt(run_var + eps)                              # (Cout,)
    wd = jnp.transpose(w_dw[:, 0, :, :], (1, 2, 0)).reshape(9, Cin)      # (9, Cin)
    wp = jnp.transpose(w_pw[:, :, 0, 0], (1, 0)) * scale[None, :]        # (Cin, Cout)
    wf = (wd[:, :, None] * wp[None, :, :]).reshape(9 * Cin, Cout)        # (9*Cin, Cout)
    wf = wf.astype(cmp_dtype)
    shift = ((b_pw - run_mean) * scale + beta).reshape(1, Cout).astype(jnp.float32)

    kernel = functools.partial(_sep_conv_kernel, chunk_rows=chunk_rows,
                               approx_swish=mxu_bf16)

    out_nhwc = pl.pallas_call(
        kernel,
        out_shape=jax.ShapeDtypeStruct((N, H, W, Cout), x_nchw.dtype),
        grid_spec=pltpu.PrefetchScalarGridSpec(
            num_scalar_prefetch=0,
            grid=(N, n_strips),
            in_specs=[
                # Main strip: padded rows [i*TH, i*TH + TH).
                pl.BlockSpec((1, TH, W + 2, Cin), lambda n, i: (n, i, 0, 0)),
                # Single 2-row halo block below the strip (TH even => aligned).
                pl.BlockSpec((1, 2, W + 2, Cin),
                             lambda n, i: (n, (i + 1) * (TH // 2), 0, 0)),
                pl.BlockSpec((9 * Cin, Cout), lambda n, i: (0, 0)),
                pl.BlockSpec((1, Cout), lambda n, i: (0, 0)),
            ],
            out_specs=pl.BlockSpec((1, TH, W, Cout), lambda n, i: (n, i, 0, 0)),
            scratch_shapes=[pltpu.VMEM((TH * W, 9 * Cin), cmp_dtype)],
        ),
        compiler_params=pltpu.CompilerParams(
            dimension_semantics=("parallel", "parallel"),
            vmem_limit_bytes=vmem_limit,
        ),
    )(x_pad, x_pad, wf, shift)

    return jnp.transpose(out_nhwc, (0, 3, 1, 2))


def _reference(x_nchw, w_dw, w_pw, b_pw, gamma, beta, run_mean, run_var, eps=1e-3):
    """Pure-JAX reference (lax conv) for correctness checking."""
    Cin = x_nchw.shape[1]
    dn = jax.lax.conv_dimension_numbers(x_nchw.shape, w_dw.shape,
                                        ("NCHW", "OIHW", "NCHW"))
    y = jax.lax.conv_general_dilated(
        x_nchw, w_dw, window_strides=(1, 1), padding=((1, 1), (1, 1)),
        dimension_numbers=dn, feature_group_count=Cin)
    dn2 = jax.lax.conv_dimension_numbers(y.shape, w_pw.shape,
                                         ("NCHW", "OIHW", "NCHW"))
    y = jax.lax.conv_general_dilated(
        y, w_pw, window_strides=(1, 1), padding=((0, 0), (0, 0)),
        dimension_numbers=dn2)
    y = y + b_pw[None, :, None, None]
    y = (y - run_mean[None, :, None, None]) / jnp.sqrt(
        run_var[None, :, None, None] + eps)
    y = y * gamma[None, :, None, None] + beta[None, :, None, None]
    return y * jax.nn.sigmoid(y)


if __name__ == "__main__":
    key = jax.random.PRNGKey(0)
    N, Cin, H, W = 2, 4, 16, 16
    Cout = Cin  # out_channels defaults to in_channels

    k = jax.random.split(key, 8)
    x = jax.random.normal(k[0], (N, Cin, H, W), jnp.float32)
    w_dw = jax.random.normal(k[1], (Cin, 1, 3, 3), jnp.float32) * 0.3
    w_pw = jax.random.normal(k[2], (Cout, Cin, 1, 1), jnp.float32) * 0.3
    b_pw = jax.random.normal(k[3], (Cout,), jnp.float32) * 0.1
    gamma = jax.random.normal(k[4], (Cout,), jnp.float32) * 0.1 + 1.0
    beta = jax.random.normal(k[5], (Cout,), jnp.float32) * 0.1
    run_mean = jax.random.normal(k[6], (Cout,), jnp.float32) * 0.1
    run_var = jnp.abs(jax.random.normal(k[7], (Cout,), jnp.float32)) * 0.5 + 0.5

    ref = _reference(x, w_dw, w_pw, b_pw, gamma, beta, run_mean, run_var)

    # 1) f32 verification path (exact sigmoid, f32 MXU feed), auto strip height.
    out_f32 = jax.block_until_ready(
        separable_conv_block(x, w_dw, w_pw, b_pw, gamma, beta, run_mean, run_var,
                             mxu_bf16=False))
    assert out_f32.shape == (N, Cout, H, W)
    assert jnp.allclose(out_f32, ref, atol=1e-4, rtol=1e-4), "f32 path mismatch"

    # 2) Forced multi-strip tiling (4 strips), f32: validates the halo indexing.
    out_strip = jax.block_until_ready(
        separable_conv_block(x, w_dw, w_pw, b_pw, gamma, beta, run_mean, run_var,
                             strip_h=4, mxu_bf16=False))
    assert jnp.allclose(out_strip, ref, atol=1e-4, rtol=1e-4), "strip-halo mismatch"

    # 3) Default fast path: bf16 MXU feed + approx-EUP Swish, auto strip height.
    out_bf = jax.block_until_ready(
        separable_conv_block(x, w_dw, w_pw, b_pw, gamma, beta, run_mean, run_var))
    assert jnp.allclose(out_bf, ref, atol=5e-2, rtol=5e-2), "bf16 path mismatch"

    # 4) bf16 with explicit 2-strip tiling (halo path + fast path together).
    out_bf_s = jax.block_until_ready(
        separable_conv_block(x, w_dw, w_pw, b_pw, gamma, beta, run_mean, run_var,
                             strip_h=8))
    assert jnp.allclose(out_bf_s, ref, atol=5e-2, rtol=5e-2), "bf16 strip mismatch"

    print("KERNEL_OK")
</pallas_src>

<mosaic_0001>
module attributes {stable_mosaic.version = 11 : i64} {
  func.func @_sep_conv_kernel(%arg0: i32, %arg1: i32, %arg2: memref<1x16x18x4xf32, #tpu.memory_space<vmem>>, %arg3: memref<1x2x18x4xf32, #tpu.memory_space<vmem>>, %arg4: memref<36x4xf32, #tpu.memory_space<vmem>>, %arg5: memref<1x4xf32, #tpu.memory_space<vmem>>, %arg6: memref<1x16x16x4xf32, #tpu.memory_space<vmem>>, %arg7: memref<256x36xf32, #tpu.memory_space<vmem>>) attributes {dimension_semantics = [#tpu.dimension_semantics<parallel>, #tpu.dimension_semantics<parallel>], iteration_bounds = array<i64: 2, 1>, scalar_prefetch = 0 : i64, scratch_operands = 1 : i64, tpu.core_type = #tpu.core_type<tc>, window_params = [{transform_indices = @transform_0, window_bounds = array<i64: 1, 16, 18, 4>}, {transform_indices = @transform_1, window_bounds = array<i64: 1, 2, 18, 4>}, {pipeline_mode = #tpu.pipeline_mode<synchronous>, transform_indices = @transform_2, window_bounds = array<i64: 36, 4>}, {pipeline_mode = #tpu.pipeline_mode<synchronous>, transform_indices = @transform_3, window_bounds = array<i64: 1, 4>}, {transform_indices = @transform_4, window_bounds = array<i64: 1, 16, 16, 4>}]} {
    %c0 = arith.constant 0 : index
    %c0_0 = arith.constant 0 : index
    %c0_1 = arith.constant 0 : index
    %c0_2 = arith.constant 0 : index
    %0 = vector.load %arg3[%c0, %c0_0, %c0_1, %c0_2] : memref<1x2x18x4xf32, #tpu.memory_space<vmem>>, vector<1x2x18x4xf32>
    %1 = vector.shape_cast %0 : vector<1x2x18x4xf32> to vector<2x18x4xf32>
    %c0_3 = arith.constant 0 : index
    %c0_4 = arith.constant 0 : index
    %c0_5 = arith.constant 0 : index
    %c0_6 = arith.constant 0 : index
    %2 = vector.load %arg2[%c0_3, %c0_4, %c0_5, %c0_6] : memref<1x16x18x4xf32, #tpu.memory_space<vmem>>, vector<1x16x16x4xf32>
    %3 = vector.shape_cast %2 : vector<1x16x16x4xf32> to vector<16x16x4xf32>
    %4 = vector.shape_cast %3 : vector<16x16x4xf32> to vector<256x4xf32>
    %c0_7 = arith.constant 0 : index
    %c0_8 = arith.constant 0 : index
    %5 = vector.load %arg7[%c0_7, %c0_8] : memref<256x36xf32, #tpu.memory_space<vmem>>, vector<256x4xf32>
    tpu.vector_store %arg7[%c0_7, %c0_8], %4 {strides = array<i32>} : memref<256x36xf32, #tpu.memory_space<vmem>>, vector<256x4xf32>,
    %c0_9 = arith.constant 0 : index
    %c0_10 = arith.constant 0 : index
    %c1 = arith.constant 1 : index
    %c0_11 = arith.constant 0 : index
    %6 = vector.load %arg2[%c0_9, %c0_10, %c1, %c0_11] : memref<1x16x18x4xf32, #tpu.memory_space<vmem>>, vector<1x16x16x4xf32>
    %7 = vector.shape_cast %6 : vector<1x16x16x4xf32> to vector<16x16x4xf32>
    %8 = vector.shape_cast %7 : vector<16x16x4xf32> to vector<256x4xf32>
    %c0_12 = arith.constant 0 : index
    %c4 = arith.constant 4 : index
    %9 = vector.load %arg7[%c0_12, %c4] : memref<256x36xf32, #tpu.memory_space<vmem>>, vector<256x4xf32>
    tpu.vector_store %arg7[%c0_12, %c4], %8 {strides = array<i32>} : memref<256x36xf32, #tpu.memory_space<vmem>>, vector<256x4xf32>,
    %c0_13 = arith.constant 0 : index
    %c0_14 = arith.constant 0 : index
    %c2 = arith.constant 2 : index
    %c0_15 = arith.constant 0 : index
    %10 = vector.load %arg2[%c0_13, %c0_14, %c2, %c0_15] : memref<1x16x18x4xf32, #tpu.memory_space<vmem>>, vector<1x16x16x4xf32>
    %11 = vector.shape_cast %10 : vector<1x16x16x4xf32> to vector<16x16x4xf32>
    %12 = vector.shape_cast %11 : vector<16x16x4xf32> to vector<256x4xf32>
    %c0_16 = arith.constant 0 : index
    %c8 = arith.constant 8 : index
    %13 = vector.load %arg7[%c0_16, %c8] : memref<256x36xf32, #tpu.memory_space<vmem>>, vector<256x4xf32>
    tpu.vector_store %arg7[%c0_16, %c8], %12 {strides = array<i32>} : memref<256x36xf32, #tpu.memory_space<vmem>>, vector<256x4xf32>,
    %c0_17 = arith.constant 0 : index
    %c1_18 = arith.constant 1 : index
    %c0_19 = arith.constant 0 : index
    %c0_20 = arith.constant 0 : index
    %14 = vector.load %arg2[%c0_17, %c1_18, %c0_19, %c0_20] : memref<1x16x18x4xf32, #tpu.memory_space<vmem>>, vector<1x15x16x4xf32>
    %15 = vector.shape_cast %14 : vector<1x15x16x4xf32> to vector<15x16x4xf32>
    %16 = vector.shape_cast %15 : vector<15x16x4xf32> to vector<240x4xf32>
    %c0_21 = arith.constant 0 : index
    %c12 = arith.constant 12 : index
    %17 = vector.load %arg7[%c0_21, %c12] : memref<256x36xf32, #tpu.memory_space<vmem>>, vector<240x4xf32>
    tpu.vector_store %arg7[%c0_21, %c12], %16 {strides = array<i32>} : memref<256x36xf32, #tpu.memory_space<vmem>>, vector<240x4xf32>,
    %18 = vector.extract_strided_slice %1 {offsets = [0, 0, 0], sizes = [1, 16, 4], strides = [1, 1, 1]} : vector<2x18x4xf32> to vector<1x16x4xf32>
    %19 = vector.shape_cast %18 : vector<1x16x4xf32> to vector<16x4xf32>
    %c240 = arith.constant 240 : index
    %c12_22 = arith.constant 12 : index
    %20 = vector.load %arg7[%c240, %c12_22] : memref<256x36xf32, #tpu.memory_space<vmem>>, vector<16x4xf32>
    tpu.vector_store %arg7[%c240, %c12_22], %19 {strides = array<i32>} : memref<256x36xf32, #tpu.memory_space<vmem>>, vector<16x4xf32>,
    %c0_23 = arith.constant 0 : index
    %c1_24 = arith.constant 1 : index
    %c1_25 = arith.constant 1 : index
    %c0_26 = arith.constant 0 : index
    %21 = vector.load %arg2[%c0_23, %c1_24, %c1_25, %c0_26] : memref<1x16x18x4xf32, #tpu.memory_space<vmem>>, vector<1x15x16x4xf32>
    %22 = vector.shape_cast %21 : vector<1x15x16x4xf32> to vector<15x16x4xf32>
    %23 = vector.shape_cast %22 : vector<15x16x4xf32> to vector<240x4xf32>
    %c0_27 = arith.constant 0 : index
    %c16 = arith.constant 16 : index
    %24 = vector.load %arg7[%c0_27, %c16] : memref<256x36xf32, #tpu.memory_space<vmem>>, vector<240x4xf32>
    tpu.vector_store %arg7[%c0_27, %c16], %23 {strides = array<i32>} : memref<256x36xf32, #tpu.memory_space<vmem>>, vector<240x4xf32>,
    %25 = vector.extract_strided_slice %1 {offsets = [0, 1, 0], sizes = [1, 16, 4], strides = [1, 1, 1]} : vector<2x18x4xf32> to vector<1x16x4xf32>
    %26 = vector.shape_cast %25 : vector<1x16x4xf32> to vector<16x4xf32>
    %c240_28 = arith.constant 240 : index
    %c16_29 = arith.constant 16 : index
    %27 = vector.load %arg7[%c240_28, %c16_29] : memref<256x36xf32, #tpu.memory_space<vmem>>, vector<16x4xf32>
    tpu.vector_store %arg7[%c240_28, %c16_29], %26 {strides = array<i32>} : memref<256x36xf32, #tpu.memory_space<vmem>>, vector<16x4xf32>,
    %c0_30 = arith.constant 0 : index
    %c1_31 = arith.constant 1 : index
    %c2_32 = arith.constant 2 : index
    %c0_33 = arith.constant 0 : index
    %28 = vector.load %arg2[%c0_30, %c1_31, %c2_32, %c0_33] : memref<1x16x18x4xf32, #tpu.memory_space<vmem>>, vector<1x15x16x4xf32>
    %29 = vector.shape_cast %28 : vector<1x15x16x4xf32> to vector<15x16x4xf32>
    %30 = vector.shape_cast %29 : vector<15x16x4xf32> to vector<240x4xf32>
    %c0_34 = arith.constant 0 : index
    %c20 = arith.constant 20 : index
    %31 = vector.load %arg7[%c0_34, %c20] : memref<256x36xf32, #tpu.memory_space<vmem>>, vector<240x4xf32>
    tpu.vector_store %arg7[%c0_34, %c20], %30 {strides = array<i32>} : memref<256x36xf32, #tpu.memory_space<vmem>>, vector<240x4xf32>,
    %32 = vector.extract_strided_slice %1 {offsets = [0, 2, 0], sizes = [1, 16, 4], strides = [1, 1, 1]} : vector<2x18x4xf32> to vector<1x16x4xf32>
    %33 = vector.shape_cast %32 : vector<1x16x4xf32> to vector<16x4xf32>
    %c240_35 = arith.constant 240 : index
    %c20_36 = arith.constant 20 : index
    %34 = vector.load %arg7[%c240_35, %c20_36] : memref<256x36xf32, #tpu.memory_space<vmem>>, vector<16x4xf32>
    tpu.vector_store %arg7[%c240_35, %c20_36], %33 {strides = array<i32>} : memref<256x36xf32, #tpu.memory_space<vmem>>, vector<16x4xf32>,
    %c0_37 = arith.constant 0 : index
    %c2_38 = arith.constant 2 : index
    %c0_39 = arith.constant 0 : index
    %c0_40 = arith.constant 0 : index
    %35 = vector.load %arg2[%c0_37, %c2_38, %c0_39, %c0_40] : memref<1x16x18x4xf32, #tpu.memory_space<vmem>>, vector<1x14x16x4xf32>
    %36 = vector.shape_cast %35 : vector<1x14x16x4xf32> to vector<14x16x4xf32>
    %37 = vector.shape_cast %36 : vector<14x16x4xf32> to vector<224x4xf32>
    %c0_41 = arith.constant 0 : index
    %c24 = arith.constant 24 : index
    %38 = vector.load %arg7[%c0_41, %c24] : memref<256x36xf32, #tpu.memory_space<vmem>>, vector<224x4xf32>
    tpu.vector_store %arg7[%c0_41, %c24], %37 {strides = array<i32>} : memref<256x36xf32, #tpu.memory_space<vmem>>, vector<224x4xf32>,
    %39 = vector.extract_strided_slice %1 {offsets = [0, 0, 0], sizes = [2, 16, 4], strides = [1, 1, 1]} : vector<2x18x4xf32> to vector<2x16x4xf32>
    %40 = vector.shape_cast %39 : vector<2x16x4xf32> to vector<32x4xf32>
    %c224 = arith.constant 224 : index
    %c24_42 = arith.constant 24 : index
    %41 = vector.load %arg7[%c224, %c24_42] : memref<256x36xf32, #tpu.memory_space<vmem>>, vector<32x4xf32>
    tpu.vector_store %arg7[%c224, %c24_42], %40 {strides = array<i32>} : memref<256x36xf32, #tpu.memory_space<vmem>>, vector<32x4xf32>,
    %c0_43 = arith.constant 0 : index
    %c2_44 = arith.constant 2 : index
    %c1_45 = arith.constant 1 : index
    %c0_46 = arith.constant 0 : index
    %42 = vector.load %arg2[%c0_43, %c2_44, %c1_45, %c0_46] : memref<1x16x18x4xf32, #tpu.memory_space<vmem>>, vector<1x14x16x4xf32>
    %43 = vector.shape_cast %42 : vector<1x14x16x4xf32> to vector<14x16x4xf32>
    %44 = vector.shape_cast %43 : vector<14x16x4xf32> to vector<224x4xf32>
    %c0_47 = arith.constant 0 : index
    %c28 = arith.constant 28 : index
    %45 = vector.load %arg7[%c0_47, %c28] : memref<256x36xf32, #tpu.memory_space<vmem>>, vector<224x4xf32>
    tpu.vector_store %arg7[%c0_47, %c28], %44 {strides = array<i32>} : memref<256x36xf32, #tpu.memory_space<vmem>>, vector<224x4xf32>,
    %46 = vector.extract_strided_slice %1 {offsets = [0, 1, 0], sizes = [2, 16, 4], strides = [1, 1, 1]} : vector<2x18x4xf32> to vector<2x16x4xf32>
    %47 = vector.shape_cast %46 : vector<2x16x4xf32> to vector<32x4xf32>
    %c224_48 = arith.constant 224 : index
    %c28_49 = arith.constant 28 : index
    %48 = vector.load %arg7[%c224_48, %c28_49] : memref<256x36xf32, #tpu.memory_space<vmem>>, vector<32x4xf32>
    tpu.vector_store %arg7[%c224_48, %c28_49], %47 {strides = array<i32>} : memref<256x36xf32, #tpu.memory_space<vmem>>, vector<32x4xf32>,
    %c0_50 = arith.constant 0 : index
    %c2_51 = arith.constant 2 : index
    %c2_52 = arith.constant 2 : index
    %c0_53 = arith.constant 0 : index
    %49 = vector.load %arg2[%c0_50, %c2_51, %c2_52, %c0_53] : memref<1x16x18x4xf32, #tpu.memory_space<vmem>>, vector<1x14x16x4xf32>
    %50 = vector.shape_cast %49 : vector<1x14x16x4xf32> to vector<14x16x4xf32>
    %51 = vector.shape_cast %50 : vector<14x16x4xf32> to vector<224x4xf32>
    %c0_54 = arith.constant 0 : index
    %c32 = arith.constant 32 : index
    %52 = vector.load %arg7[%c0_54, %c32] : memref<256x36xf32, #tpu.memory_space<vmem>>, vector<224x4xf32>
    tpu.vector_store %arg7[%c0_54, %c32], %51 {strides = array<i32>} : memref<256x36xf32, #tpu.memory_space<vmem>>, vector<224x4xf32>,
    %53 = vector.extract_strided_slice %1 {offsets = [0, 2, 0], sizes = [2, 16, 4], strides = [1, 1, 1]} : vector<2x18x4xf32> to vector<2x16x4xf32>
    %54 = vector.shape_cast %53 : vector<2x16x4xf32> to vector<32x4xf32>
    %c224_55 = arith.constant 224 : index
    %c32_56 = arith.constant 32 : index
    %55 = vector.load %arg7[%c224_55, %c32_56] : memref<256x36xf32, #tpu.memory_space<vmem>>, vector<32x4xf32>
    tpu.vector_store %arg7[%c224_55, %c32_56], %54 {strides = array<i32>} : memref<256x36xf32, #tpu.memory_space<vmem>>, vector<32x4xf32>,
    %c0_57 = arith.constant 0 : index
    %c0_58 = arith.constant 0 : index
    %56 = vector.load %arg5[%c0_57, %c0_58] : memref<1x4xf32, #tpu.memory_space<vmem>>, vector<1x4xf32>
    %c0_59 = arith.constant 0 : index
    %c0_60 = arith.constant 0 : index
    %57 = vector.load %arg7[%c0_59, %c0_60] : memref<256x36xf32, #tpu.memory_space<vmem>>, vector<256x36xf32>
    %c0_61 = arith.constant 0 : index
    %c0_62 = arith.constant 0 : index
    %58 = vector.load %arg4[%c0_61, %c0_62] : memref<36x4xf32, #tpu.memory_space<vmem>>, vector<36x4xf32>
    %cst = arith.constant dense<0.000000e+00> : vector<256x4xf32>
    %59 = tpu.matmul %57, %58, %cst {dimension_numbers = #tpu.dot_dimension_numbers<[1], [0], [0], [1], [0, 0, 1, 1], [], []>} : vector<256x36xf32>, vector<36x4xf32>, vector<256x4xf32> -> vector<256x4xf32>
    %60 = vector.broadcast %56 : vector<1x4xf32> to vector<256x4xf32>
    %61 = arith.addf %59, %60 : vector<256x4xf32>
    %62 = arith.negf %61 : vector<256x4xf32>
    %63 = math.exp %62 : vector<256x4xf32>
    %cst_63 = arith.constant 1.000000e+00 : f32
    %64 = vector.broadcast %cst_63 : f32 to vector<256x4xf32>
    %65 = arith.addf %64, %63 : vector<256x4xf32>
    %66 = arith.divf %64, %65 : vector<256x4xf32>
    %67 = arith.mulf %61, %66 : vector<256x4xf32>
    %68 = vector.shape_cast %67 : vector<256x4xf32> to vector<16x16x4xf32>
    %c0_64 = arith.constant 0 : index
    %c0_65 = arith.constant 0 : index
    %c0_66 = arith.constant 0 : index
    %c0_67 = arith.constant 0 : index
    %69 = vector.load %arg6[%c0_64, %c0_65, %c0_66, %c0_67] : memref<1x16x16x4xf32, #tpu.memory_space<vmem>>, vector<1x16x16x4xf32>
    %70 = vector.shape_cast %69 : vector<1x16x16x4xf32> to vector<16x16x4xf32>
    %71 = vector.shape_cast %68 : vector<16x16x4xf32> to vector<1x16x16x4xf32>
    tpu.vector_store %arg6[%c0_64, %c0_65, %c0_66, %c0_67], %71 {strides = array<i32>} : memref<1x16x16x4xf32, #tpu.memory_space<vmem>>, vector<1x16x16x4xf32>,
    return
  }
  func.func @transform_0(%arg0: i32, %arg1: i32) -> (i32, i32, i32, i32) {
    %c0_i32 = arith.constant 0 : i32
    %c0_i32_0 = arith.constant 0 : i32
    %c0_i32_1 = arith.constant 0 : i32
    return %arg0, %arg1, %c0_i32, %c0_i32_0 : i32, i32, i32, i32
  }
  func.func @transform_1(%arg0: i32, %arg1: i32) -> (i32, i32, i32, i32) {
    %c1_i32 = arith.constant 1 : i32
    %0 = arith.addi %arg1, %c1_i32 : i32
    %c8_i32 = arith.constant 8 : i32
    %1 = arith.muli %0, %c8_i32 : i32
    %c0_i32 = arith.constant 0 : i32
    %c0_i32_0 = arith.constant 0 : i32
    %c0_i32_1 = arith.constant 0 : i32
    return %arg0, %1, %c0_i32, %c0_i32_0 : i32, i32, i32, i32
  }
  func.func @transform_2(%arg0: i32, %arg1: i32) -> (i32, i32) {
    %c0_i32 = arith.constant 0 : i32
    %c0_i32_0 = arith.constant 0 : i32
    %c0_i32_1 = arith.constant 0 : i32
    return %c0_i32, %c0_i32_0 : i32, i32
  }
  func.func @transform_3(%arg0: i32, %arg1: i32) -> (i32, i32) {
    %c0_i32 = arith.constant 0 : i32
    %c0_i32_0 = arith.constant 0 : i32
    %c0_i32_1 = arith.constant 0 : i32
    return %c0_i32, %c0_i32_0 : i32, i32
  }
  func.func @transform_4(%arg0: i32, %arg1: i32) -> (i32, i32, i32, i32) {
    %c0_i32 = arith.constant 0 : i32
    %c0_i32_0 = arith.constant 0 : i32
    %c0_i32_1 = arith.constant 0 : i32
    return %arg0, %arg1, %c0_i32, %c0_i32_0 : i32, i32, i32, i32
  }
}

</mosaic_0001>

<llo_original>
// kernel: separable_conv_block.1
$region0: #{separable_conv_block.1}
  #allocation0 [shape = 'u32[]', space=smem, size = 0x4, offset = 0x4, fixed_abs, tag = 'smem constant byte address 0x4 - core index']
  #allocation1 [shape = 'u32[144,128]{1,0:T(1,128)}', space=vmem, size = 0x12000, scoped, tag = 'internal scratch']
  #allocation2 [shape = 'f32[256,36]{1,0:T(8,128)}', space=vmem, size = 0x20000, scoped, tag = 'scratch operand']
  %s0 = inlined_call_operand.vmem [shape: f32[2,18,18,4], index: 0, kind: input, shape index: {}, may-alias: {0,1}]
  %s1 = inlined_call_operand.vmem [shape: f32[2,18,18,4], index: 1, kind: input, shape index: {}, may-alias: {0,1}]
  %s2 = inlined_call_operand.vmem [shape: f32[36,4], index: 2, kind: input, shape index: {}]
  %s3 = inlined_call_operand.vmem [shape: f32[1,4], index: 3, kind: input, shape index: {}]
  %s4 = inlined_call_operand.vmem [shape: f32[2,16,16,4], index: 4, kind: output, shape index: {}]
  %s5 = sld [smem:[#allocation0]]
  $region49: #{separable_conv_block.1} parent=0
    _
  %s7 = ssub.s32 1, %s5
  %s8 = scalar_select 0, %s7, %s5
  loop: start=0, step=1, limit=4
  $region2: #{separable_conv_block.1} parent=0 // loop_pre_header
    _
  $region3: #{separable_conv_block.1} parent=0 // loop_header
    %s10 = sphi 0, %s14
    %p11 = scmp.ge.s32.totalorder %s10, 4
    %s17 = sphi 0, %s29
    %s18 = sphi 0, %s25
    %s19 = sphi 0, %s17
    %s20 = sphi 0, %s18
    %s21 = sphi 0, %s19
    %s22 = sphi 0, %s20
    %s34 = sphi 0, %s36
    %s37 = sphi 0, %s34
    %s38 = sphi 0, %s37
    %s54 = sphi 0, %s38
    %s66 = sphi 0, %s68
    %s69 = sphi 0, %s66
    %s70 = sphi 0, %s69
    %s86 = sphi 0, %s70
    %s90 = sphi 0, %s90
    %s92 = sphi 0, %s90
    %s93 = sphi 0, %s92
    %s107 = sphi 0, %s93
    %s111 = sphi 0, %s111
    %s113 = sphi 0, %s111
    %s114 = sphi 0, %s113
    %s128 = sphi 0, %s114
    %s136 = sphi 0, %s138
    %s139 = sphi 0, %s136
    %s140 = sphi 0, %s139
    %s156 = sphi 0, %s140
  $region4: #{separable_conv_block.1} parent=0 // loop_header_branch
    %13 = sbr.rel (%p11) target = $region8
  $region5: #{separable_conv_block.1} parent=0 // loop_body
    %s15 = ssub.s32 %s10, 1
    %s16 = ssub.s32 %s10, 2
    %s23 = sadd.s32 1, %s18
    %p24 = scmp.ge.s32.totalorder %s23, 1
    %s25 = scalar_select %p24, 0, %s23
    %s26 = sadd.s32 1, %s17
    %s27 = scalar_select %p24, %s26, %s17
    %p28 = scmp.ge.s32.totalorder %s27, 2
    %s29 = scalar_select %p28, 0, %s27
    %s30 = ssub.s32 %s17, %s29
    %s31 = ssub.s32 %s18, %s25
    %s32 = sor.u32 %s30, %s31
    %p33 = scmp.eq.s32.totalorder %s32, 0
    %s35 = sadd.s32 %s34, 1
    %s36 = scalar_select %p33, %s34, %s35
    %p39 = pneg %p33
    %p40 = scmp.eq.s32.totalorder %s10, 1
    %p41 = por %p39, %p40
    %p42 = scmp.ne.s32.totalorder %s34, %s37
    %p43 = scmp.eq.s32.totalorder %s10, 0
    %p44 = por %p42, %p43
    %p45 = scmp.ne.s32.totalorder %s34, %s37
    %p46 = scmp.eq.s32.totalorder %s15, 1
    %p47 = por %p45, %p46
    %p48 = scmp.ne.s32.totalorder %s37, %s38
    %p49 = scmp.eq.s32.totalorder %s15, 0
    %p50 = por %p48, %p49
    %p51 = scmp.ne.s32.totalorder %s37, %s38
    %p52 = scmp.eq.s32.totalorder %s16, 1
    %p53 = por %p51, %p52
    %p55 = scmp.ne.s32.totalorder %s38, %s54
    %p56 = scmp.eq.s32.totalorder %s16, 0
    %p57 = por %p55, %p56
    %s58 = sadd.s32 %s18, 1
    %s59 = smul.u32 %s58, 8
    %s60 = sadd.s32 %s25, 1
    %s61 = smul.u32 %s60, 8
    %s62 = ssub.s32 %s17, %s29
    %s63 = ssub.s32 %s59, %s61
    %s64 = sor.u32 %s62, %s63
    %p65 = scmp.eq.s32.totalorder %s64, 0
    %s67 = sadd.s32 %s66, 1
    %s68 = scalar_select %p65, %s66, %s67
    %p71 = pneg %p65
    %p72 = scmp.eq.s32.totalorder %s10, 1
    %p73 = por %p71, %p72
    %p74 = scmp.ne.s32.totalorder %s66, %s69
    %p75 = scmp.eq.s32.totalorder %s10, 0
    %p76 = por %p74, %p75
    %p77 = scmp.ne.s32.totalorder %s66, %s69
    %p78 = scmp.eq.s32.totalorder %s15, 1
    %p79 = por %p77, %p78
    %p80 = scmp.ne.s32.totalorder %s69, %s70
    %p81 = scmp.eq.s32.totalorder %s15, 0
    %p82 = por %p80, %p81
    %p83 = scmp.ne.s32.totalorder %s69, %s70
    %p84 = scmp.eq.s32.totalorder %s16, 1
    %p85 = por %p83, %p84
    %p87 = scmp.ne.s32.totalorder %s70, %s86
    %p88 = scmp.eq.s32.totalorder %s16, 0
    %p89 = por %p87, %p88
    %s91 = sadd.s32 %s90, 1
    %p94 = scmp.eq.s32.totalorder %s10, 1
    %p95 = scmp.ne.s32.totalorder %s90, %s92
    %p96 = scmp.eq.s32.totalorder %s10, 0
    %p97 = por %p95, %p96
    %p98 = scmp.ne.s32.totalorder %s90, %s92
    %p99 = scmp.eq.s32.totalorder %s15, 1
    %p100 = por %p98, %p99
    %p101 = scmp.ne.s32.totalorder %s92, %s93
    %p102 = scmp.eq.s32.totalorder %s15, 0
    %p103 = por %p101, %p102
    %p104 = scmp.ne.s32.totalorder %s92, %s93
    %p105 = scmp.eq.s32.totalorder %s16, 1
    %p106 = por %p104, %p105
    %p108 = scmp.ne.s32.totalorder %s93, %s107
    %p109 = scmp.eq.s32.totalorder %s16, 0
    %p110 = por %p108, %p109
    %s112 = sadd.s32 %s111, 1
    %p115 = scmp.eq.s32.totalorder %s10, 1
    %p116 = scmp.ne.s32.totalorder %s111, %s113
    %p117 = scmp.eq.s32.totalorder %s10, 0
    %p118 = por %p116, %p117
    %p119 = scmp.ne.s32.totalorder %s111, %s113
    %p120 = scmp.eq.s32.totalorder %s15, 1
    %p121 = por %p119, %p120
    %p122 = scmp.ne.s32.totalorder %s113, %s114
    %p123 = scmp.eq.s32.totalorder %s15, 0
    %p124 = por %p122, %p123
    %p125 = scmp.ne.s32.totalorder %s113, %s114
    %p126 = scmp.eq.s32.totalorder %s16, 1
    %p127 = por %p125, %p126
    %p129 = scmp.ne.s32.totalorder %s114, %s128
    %p130 = scmp.eq.s32.totalorder %s16, 0
    %p131 = por %p129, %p130
    %s132 = ssub.s32 %s17, %s29
    %s133 = ssub.s32 %s18, %s25
    %s134 = sor.u32 %s132, %s133
    %p135 = scmp.eq.s32.totalorder %s134, 0
    %s137 = sadd.s32 %s136, 1
    %s138 = scalar_select %p135, %s136, %s137
    %p141 = pneg %p135
    %p142 = scmp.eq.s32.totalorder %s10, 1
    %p143 = por %p141, %p142
    %p144 = scmp.ne.s32.totalorder %s136, %s139
    %p145 = scmp.eq.s32.totalorder %s10, 0
    %p146 = por %p144, %p145
    %p147 = scmp.ne.s32.totalorder %s136, %s139
    %p148 = scmp.eq.s32.totalorder %s15, 1
    %p149 = por %p147, %p148
    %p150 = scmp.ne.s32.totalorder %s139, %s140
    %p151 = scmp.eq.s32.totalorder %s15, 0
    %p152 = por %p150, %p151
    %p153 = scmp.ne.s32.totalorder %s139, %s140
    %p154 = scmp.eq.s32.totalorder %s16, 1
    %p155 = por %p153, %p154
    %p157 = scmp.ne.s32.totalorder %s140, %s156
    %p158 = scmp.eq.s32.totalorder %s16, 0
    %p159 = por %p157, %p158
    %p160 = scmp.le.s32.totalorder 1, %s10
    %p161 = scmp.lt.s32.totalorder %s10, 3
    %p162 = pnand %p160, %p161
    %p163 = pneg %p162
    // Predicated region
    $region9: #{separable_conv_block.1} parent=5 // pred_check
      _
    $region10: #{separable_conv_block.1} parent=5 // pred_check_branch
      %165 = sbr.rel (%p162) target = $region12
    $region11: #{separable_conv_block.1} parent=5 // pred_region
      %s166 = ssub.s32 %s10, 1
      // Predicated region
      $region13: #{separable_conv_block.1} parent=11 // pred_check
        %p167 = pneg %p103
      $region14: #{separable_conv_block.1} parent=11 // pred_check_branch
        %169 = sbr.rel (%p167) target = $region16
      $region15: #{separable_conv_block.1} parent=11 // pred_region
        _
      $region16: #{separable_conv_block.1} parent=11 // pred_fallthru
        _
      // Predicated region
      $region17: #{separable_conv_block.1} parent=11 // pred_check
        %p170 = pneg %p124
      $region18: #{separable_conv_block.1} parent=11 // pred_check_branch
        %172 = sbr.rel (%p170) target = $region20
      $region19: #{separable_conv_block.1} parent=11 // pred_region
        _
      $region20: #{separable_conv_block.1} parent=11 // pred_fallthru
        _
    $region12: #{separable_conv_block.1} parent=5 // pred_fallthru
      _
    %p173 = scmp.lt.s32.totalorder %s10, 2
    // Predicated region
    $region21: #{separable_conv_block.1} parent=5 // pred_check
      %p174 = pneg %p173
    $region22: #{separable_conv_block.1} parent=5 // pred_check_branch
      %176 = sbr.rel (%p174) target = $region24
    $region23: #{separable_conv_block.1} parent=5 // pred_region
      // Predicated region
      $region25: #{separable_conv_block.1} parent=23 // pred_check
        %p177 = pneg %p44
      $region26: #{separable_conv_block.1} parent=23 // pred_check_branch
        %179 = sbr.rel (%p177) target = $region28
      $region27: #{separable_conv_block.1} parent=23 // pred_region
        %s180 = smul.u32 16, %s18
        %s181 = ssub.s32 18, %s180
        %p182 = scmp.lt.s32.totalorder %s181, 16
        %s183 = scalar_select %p182, %s181, 16
        %s184 = smul.u32 128, %s183
        %s185 = smul.u32 %s184, 3
        %p186 = scmp.lt.s32.totalorder %s17, 1
        %s187 = scalar_select %p186, %s17, 1
        %p188 = scmp.lt.s32.totalorder %s180, 17
        %s189 = scalar_select %p188, %s180, 17
        %s190 = smul.addr %s189, 3
        %s191 = smul.addr %s187, 54
        %s192 = sadd.s32 %s190, %s191
        %s193 = smul.addr %s192, 8
        %s194 = scalar_lea.vmem %s0, %s193
        %s195 = smul.u32 16, %s18
        %s196 = ssub.s32 18, %s195
        %p197 = scmp.lt.s32.totalorder %s196, 16
        %s198 = scalar_select %p197, %s196, 16
        %s199 = smul.u32 128, %s198
        %s200 = smul.u32 %s199, 3
      $region28: #{separable_conv_block.1} parent=23 // pred_fallthru
        _
      // Predicated region
      $region29: #{separable_conv_block.1} parent=23 // pred_check
        %p201 = pneg %p76
      $region30: #{separable_conv_block.1} parent=23 // pred_check_branch
        %203 = sbr.rel (%p201) target = $region32
      $region31: #{separable_conv_block.1} parent=23 // pred_region
        %s204 = sadd.s32 %s18, 1
        %s205 = smul.u32 %s204, 8
        %s206 = smul.u32 2, %s205
        %p207 = scmp.lt.s32.totalorder %s17, 1
        %s208 = scalar_select %p207, %s17, 1
        %p209 = scmp.lt.s32.totalorder %s206, 17
        %s210 = scalar_select %p209, %s206, 17
        %s211 = smul.addr %s210, 3
        %s212 = smul.addr %s208, 54
        %s213 = sadd.s32 %s211, %s212
        %s214 = smul.addr %s213, 8
        %s215 = scalar_lea.vmem %s1, %s214
        %s216 = sadd.s32 %s18, 1
        %s217 = smul.u32 %s216, 8
        %s218 = smul.u32 2, %s217
      $region32: #{separable_conv_block.1} parent=23 // pred_fallthru
        _
    $region24: #{separable_conv_block.1} parent=5 // pred_fallthru
      _
    %p219 = scmp.le.s32.totalorder 1, %s10
    %p220 = scmp.lt.s32.totalorder %s10, 3
    %p221 = pnand %p219, %p220
    %p222 = pneg %p221
    // Predicated region
    $region33: #{separable_conv_block.1} parent=5 // pred_check
      _
    $region34: #{separable_conv_block.1} parent=5 // pred_check_branch
      %224 = sbr.rel (%p221) target = $region36
    $region35: #{separable_conv_block.1} parent=5 // pred_region
      %s225 = ssub.s32 %s10, 1
      %s226 = smul.u32 16, %s20
      %s227 = ssub.s32 18, %s226
      %p228 = scmp.lt.s32.totalorder %s227, 16
      %s229 = scalar_select %p228, %s227, 16
      %s230 = smul.u32 128, %s229
      %s231 = smul.u32 %s230, 3
      %p232 = scmp.lt.s32.totalorder %s19, 1
      %s233 = scalar_select %p232, %s19, 1
      %p234 = scmp.lt.s32.totalorder %s226, 17
      %s235 = scalar_select %p234, %s226, 17
      %s236 = smul.addr %s235, 3
      %s237 = smul.addr %s233, 54
      %s238 = sadd.s32 %s236, %s237
      %s239 = smul.addr %s238, 8
      %s240 = scalar_lea.vmem %s0, %s239
      %p241 = pneg %p50
      %p242 = pneg %p47
      %s243 = sadd.s32 %s20, 1
      %s244 = smul.u32 %s243, 8
      %s245 = smul.u32 2, %s244
      %p246 = scmp.lt.s32.totalorder %s19, 1
      %s247 = scalar_select %p246, %s19, 1
      %p248 = scmp.lt.s32.totalorder %s245, 17
      %s249 = scalar_select %p248, %s245, 17
      %s250 = smul.addr %s249, 3
      %s251 = smul.addr %s247, 54
      %s252 = sadd.s32 %s250, %s251
      %s253 = smul.addr %s252, 8
      %s254 = scalar_lea.vmem %s1, %s253
      %p255 = pneg %p82
      %p256 = pneg %p79
      %p257 = pneg %p103
      %p258 = pneg %p100
      %p259 = pneg %p124
      %p260 = pneg %p121
      %p261 = pneg %p152
      %p262 = pneg %p149
      %s263 = smul.u32 16, %s20
      %p264 = scmp.lt.s32.totalorder %s19, 1
      %s265 = scalar_select %p264, %s19, 1
      %p266 = scmp.lt.s32.totalorder %s263, 15
      %s267 = scalar_select %p266, %s263, 15
      %s268 = smul.addr %s267, 2
      %s269 = smul.addr %s265, 32
      %s270 = sadd.s32 %s268, %s269
      %s271 = smul.addr %s270, 8
      %s272 = scalar_lea.vmem %s4, %s271
      %s273 = smul.u32 16, %s20
      %s274 = ssub.s32 18, %s273
      %p275 = scmp.lt.s32.totalorder %s274, 16
      %s276 = scalar_select %p275, %s274, 16
      %s277 = smul.u32 128, %s276
      %s278 = smul.u32 %s277, 3
      %p279 = scmp.lt.s32.totalorder %s19, 1
      %s280 = scalar_select %p279, %s19, 1
      %p281 = scmp.lt.s32.totalorder %s273, 17
      %s282 = scalar_select %p281, %s273, 17
      %s283 = smul.addr %s282, 3
      %s284 = smul.addr %s280, 54
      %s285 = sadd.s32 %s283, %s284
      %s286 = smul.addr %s285, 8
      %s287 = scalar_lea.vmem %s0, %s286
      %s288 = smul.u32 16, %s20
      %s289 = ssub.s32 18, %s288
      %p290 = scmp.lt.s32.totalorder %s289, 16
      %s291 = scalar_select %p290, %s289, 16
      %s292 = smul.u32 128, %s291
      %s293 = smul.u32 %s292, 3
      %s294 = sadd.s32 %s20, 1
      %s295 = smul.u32 %s294, 8
      %s296 = smul.u32 2, %s295
      %p297 = scmp.lt.s32.totalorder %s19, 1
      %s298 = scalar_select %p297, %s19, 1
      %p299 = scmp.lt.s32.totalorder %s296, 17
      %s300 = scalar_select %p299, %s296, 17
      %s301 = smul.addr %s300, 3
      %s302 = smul.addr %s298, 54
      %s303 = sadd.s32 %s301, %s302
      %s304 = smul.addr %s303, 8
      %s305 = scalar_lea.vmem %s1, %s304
      %s306 = sadd.s32 %s20, 1
      %s307 = smul.u32 %s306, 8
      %s308 = smul.u32 2, %s307
      %s309 = smul.u32 16, %s20
      %p310 = scmp.lt.s32.totalorder %s19, 1
      %s311 = scalar_select %p310, %s19, 1
      %p312 = scmp.lt.s32.totalorder %s309, 15
      %s313 = scalar_select %p312, %s309, 15
      %s314 = smul.addr %s313, 2
      %s315 = smul.addr %s311, 32
      %s316 = sadd.s32 %s314, %s315
      %s317 = smul.addr %s316, 8
      %s318 = scalar_lea.vmem %s4, %s317
      %s319 = smul.u32 16, %s20
      %v320 = vld [vmem:[%s305] sm:$0xff]
      %v321 = vld [vmem:[%s305 + $0x8] sm:$0xff]
      %v322 = vld [vmem:[%s305 + $0x10] sm:$0x3]
      %v323 = vld [vmem:[%s305 + $0x18] sm:$0xff]
      %v324 = vld [vmem:[%s305 + $0x20] sm:$0xff]
      %v325 = vld [vmem:[%s305 + $0x28] sm:$0x3]
      %v326 = vld [vmem:[%s287] sm:$0xff]
      %v327 = vld [vmem:[%s287 + $0x8] sm:$0xff]
      %v328 = vld [vmem:[%s287 + $0x18] sm:$0xff]
      %v329 = vld [vmem:[%s287 + $0x20] sm:$0xff]
      %v330 = vld [vmem:[%s287 + $0x30] sm:$0xff]
      %v331 = vld [vmem:[%s287 + $0x38] sm:$0xff]
      %v332 = vld [vmem:[%s287 + $0x48] sm:$0xff]
      %v333 = vld [vmem:[%s287 + $0x50] sm:$0xff]
      %v334 = vld [vmem:[%s287 + $0x60] sm:$0xff]
      %v335 = vld [vmem:[%s287 + $0x68] sm:$0xff]
      %v336 = vld [vmem:[%s287 + $0x78] sm:$0xff]
      %v337 = vld [vmem:[%s287 + $0x80] sm:$0xff]
      %v338 = vld [vmem:[%s287 + $0x90] sm:$0xff]
      %v339 = vld [vmem:[%s287 + $0x98] sm:$0xff]
      %v340 = vld [vmem:[%s287 + $0xa8] sm:$0xff]
      %v341 = vld [vmem:[%s287 + $0xb0] sm:$0xff]
      %v342 = vld [vmem:[%s287 + $0xc0] sm:$0xff]
      %v343 = vld [vmem:[%s287 + $0xc8] sm:$0xff]
      %v344 = vld [vmem:[%s287 + $0xd8] sm:$0xff]
      %v345 = vld [vmem:[%s287 + $0xe0] sm:$0xff]
      %v346 = vld [vmem:[%s287 + $0xf0] sm:$0xff]
      %v347 = vld [vmem:[%s287 + $0xf8] sm:$0xff]
      %v348 = vld [vmem:[%s287 + $0x108] sm:$0xff]
      %v349 = vld [vmem:[%s287 + $0x110] sm:$0xff]
      %v350 = vld [vmem:[%s287 + $0x120] sm:$0xff]
      %v351 = vld [vmem:[%s287 + $0x128] sm:$0xff]
      %v352 = vld [vmem:[%s287 + $0x138] sm:$0xff]
      %v353 = vld [vmem:[%s287 + $0x140] sm:$0xff]
      %v354 = vld [vmem:[%s287 + $0x150] sm:$0xff]
      %v355 = vld [vmem:[%s287 + $0x158] sm:$0xff]
      %v356 = vld [vmem:[%s287 + $0x168] sm:$0xff]
      %v357 = vld [vmem:[%s287 + $0x170] sm:$0xff]
      %vm358 = vcmask 31744
      %359 = vst.msk [vmem:[#allocation2] sm:$0xff] %vm358, %v326
      %360 = vst.msk [vmem:[#allocation2 + $0x8] sm:$0xff] %vm358, %v327
      %361 = vst.msk [vmem:[#allocation2 + $0x10] sm:$0xff] %vm358, %v328
      %362 = vst.msk [vmem:[#allocation2 + $0x18] sm:$0xff] %vm358, %v329
      %363 = vst.msk [vmem:[#allocation2 + $0x20] sm:$0xff] %vm358, %v330
      %364 = vst.msk [vmem:[#allocation2 + $0x28] sm:$0xff] %vm358, %v331
      %365 = vst.msk [vmem:[#allocation2 + $0x30] sm:$0xff] %vm358, %v332
      %366 = vst.msk [vmem:[#allocation2 + $0x38] sm:$0xff] %vm358, %v333
      %367 = vst.msk [vmem:[#allocation2 + $0x40] sm:$0xff] %vm358, %v334
      %368 = vst.msk [vmem:[#allocation2 + $0x48] sm:$0xff] %vm358, %v335
      %369 = vst.msk [vmem:[#allocation2 + $0x50] sm:$0xff] %vm358, %v336
      %370 = vst.msk [vmem:[#allocation2 + $0x58] sm:$0xff] %vm358, %v337
      %371 = vst.msk [vmem:[#allocation2 + $0x60] sm:$0xff] %vm358, %v338
      %372 = vst.msk [vmem:[#allocation2 + $0x68] sm:$0xff] %vm358, %v339
      %373 = vst.msk [vmem:[#allocation2 + $0x70] sm:$0xff] %vm358, %v340
      %374 = vst.msk [vmem:[#allocation2 + $0x78] sm:$0xff] %vm358, %v341
      %375 = vst.msk [vmem:[#allocation2 + $0x80] sm:$0xff] %vm358, %v342
      %376 = vst.msk [vmem:[#allocation2 + $0x88] sm:$0xff] %vm358, %v343
      %377 = vst.msk [vmem:[#allocation2 + $0x90] sm:$0xff] %vm358, %v344
      %378 = vst.msk [vmem:[#allocation2 + $0x98] sm:$0xff] %vm358, %v345
      %379 = vst.msk [vmem:[#allocation2 + $0xa0] sm:$0xff] %vm358, %v346
      %380 = vst.msk [vmem:[#allocation2 + $0xa8] sm:$0xff] %vm358, %v347
      %381 = vst.msk [vmem:[#allocation2 + $0xb0] sm:$0xff] %vm358, %v348
      %382 = vst.msk [vmem:[#allocation2 + $0xb8] sm:$0xff] %vm358, %v349
      %383 = vst.msk [vmem:[#allocation2 + $0xc0] sm:$0xff] %vm358, %v350
      %384 = vst.msk [vmem:[#allocation2 + $0xc8] sm:$0xff] %vm358, %v351
      %385 = vst.msk [vmem:[#allocation2 + $0xd0] sm:$0xff] %vm358, %v352
      %386 = vst.msk [vmem:[#allocation2 + $0xd8] sm:$0xff] %vm358, %v353
      %387 = vst.msk [vmem:[#allocation2 + $0xe0] sm:$0xff] %vm358, %v354
      %388 = vst.msk [vmem:[#allocation2 + $0xe8] sm:$0xff] %vm358, %v355
      %389 = vst.msk [vmem:[#allocation2 + $0xf0] sm:$0xff] %vm358, %v356
      %390 = vst.msk [vmem:[#allocation2 + $0xf8] sm:$0xff] %vm358, %v357
      %v391 = vld [vmem:[%s287 + $0x1] sm:$0xff]
      %v392 = vld [vmem:[%s287 + $0x9] sm:$0xff]
      %v393 = vld [vmem:[%s287 + $0x19] sm:$0xff]
      %v394 = vld [vmem:[%s287 + $0x21] sm:$0xff]
      %v395 = vld [vmem:[%s287 + $0x31] sm:$0xff]
      %v396 = vld [vmem:[%s287 + $0x39] sm:$0xff]
      %v397 = vld [vmem:[%s287 + $0x49] sm:$0xff]
      %v398 = vld [vmem:[%s287 + $0x51] sm:$0xff]
      %v399 = vld [vmem:[%s287 + $0x61] sm:$0xff]
      %v400 = vld [vmem:[%s287 + $0x69] sm:$0xff]
      %v401 = vld [vmem:[%s287 + $0x79] sm:$0xff]
      %v402 = vld [vmem:[%s287 + $0x81] sm:$0xff]
      %v403 = vld [vmem:[%s287 + $0x91] sm:$0xff]
      %v404 = vld [vmem:[%s287 + $0x99] sm:$0xff]
      %v405 = vld [vmem:[%s287 + $0xa9] sm:$0xff]
      %v406 = vld [vmem:[%s287 + $0xb1] sm:$0xff]
      %v407 = vld [vmem:[%s287 + $0xc1] sm:$0xff]
      %v408 = vld [vmem:[%s287 + $0xc9] sm:$0xff]
      %v409 = vld [vmem:[%s287 + $0xd9] sm:$0xff]
      %v410 = vld [vmem:[%s287 + $0xe1] sm:$0xff]
      %v411 = vld [vmem:[%s287 + $0xf1] sm:$0xff]
      %v412 = vld [vmem:[%s287 + $0xf9] sm:$0xff]
      %v413 = vld [vmem:[%s287 + $0x109] sm:$0xff]
      %v414 = vld [vmem:[%s287 + $0x111] sm:$0xff]
      %v415 = vld [vmem:[%s287 + $0x121] sm:$0xff]
      %v416 = vld [vmem:[%s287 + $0x129] sm:$0xff]
      %v417 = vld [vmem:[%s287 + $0x139] sm:$0xff]
      %v418 = vld [vmem:[%s287 + $0x141] sm:$0xff]
      %v419 = vld [vmem:[%s287 + $0x151] sm:$0xff]
      %v420 = vld [vmem:[%s287 + $0x159] sm:$0xff]
      %v421 = vld [vmem:[%s287 + $0x169] sm:$0xff]
      %v422 = vld [vmem:[%s287 + $0x171] sm:$0xff]
      %455 = vrot.lane.b32.xlu0 %v391, 4
      %v456 = vpop.permute.xlu0 %455
      %457 = vrot.lane.b32.xlu0 %v392, 4
      %v458 = vpop.permute.xlu0 %457
      %459 = vrot.lane.b32.xlu0 %v393, 4
      %v460 = vpop.permute.xlu0 %459
      %461 = vrot.lane.b32.xlu0 %v394, 4
      %v462 = vpop.permute.xlu0 %461
      %463 = vrot.lane.b32.xlu0 %v395, 4
      %v464 = vpop.permute.xlu0 %463
      %465 = vrot.lane.b32.xlu0 %v396, 4
      %v466 = vpop.permute.xlu0 %465
      %467 = vrot.lane.b32.xlu0 %v397, 4
      %v468 = vpop.permute.xlu0 %467
      %469 = vrot.lane.b32.xlu0 %v398, 4
      %v470 = vpop.permute.xlu0 %469
      %471 = vrot.lane.b32.xlu0 %v399, 4
      %v472 = vpop.permute.xlu0 %471
      %473 = vrot.lane.b32.xlu0 %v400, 4
      %v474 = vpop.permute.xlu0 %473
      %475 = vrot.lane.b32.xlu0 %v401, 4
      %v476 = vpop.permute.xlu0 %475
      %477 = vrot.lane.b32.xlu0 %v402, 4
      %v478 = vpop.permute.xlu0 %477
      %479 = vrot.lane.b32.xlu0 %v403, 4
      %v480 = vpop.permute.xlu0 %479
      %481 = vrot.lane.b32.xlu0 %v404, 4
      %v482 = vpop.permute.xlu0 %481
      %483 = vrot.lane.b32.xlu0 %v405, 4
      %v484 = vpop.permute.xlu0 %483
      %485 = vrot.lane.b32.xlu0 %v406, 4
      %v486 = vpop.permute.xlu0 %485
      %487 = vrot.lane.b32.xlu0 %v407, 4
      %v488 = vpop.permute.xlu0 %487
      %489 = vrot.lane.b32.xlu0 %v408, 4
      %v490 = vpop.permute.xlu0 %489
      %491 = vrot.lane.b32.xlu0 %v409, 4
      %v492 = vpop.permute.xlu0 %491
      %493 = vrot.lane.b32.xlu0 %v410, 4
      %v494 = vpop.permute.xlu0 %493
      %495 = vrot.lane.b32.xlu0 %v411, 4
      %v496 = vpop.permute.xlu0 %495
      %497 = vrot.lane.b32.xlu0 %v412, 4
      %v498 = vpop.permute.xlu0 %497
      %499 = vrot.lane.b32.xlu0 %v413, 4
      %v500 = vpop.permute.xlu0 %499
      %501 = vrot.lane.b32.xlu0 %v414, 4
      %v502 = vpop.permute.xlu0 %501
      %503 = vrot.lane.b32.xlu0 %v415, 4
      %v504 = vpop.permute.xlu0 %503
      %505 = vrot.lane.b32.xlu0 %v416, 4
      %v506 = vpop.permute.xlu0 %505
      %507 = vrot.lane.b32.xlu0 %v417, 4
      %v508 = vpop.permute.xlu0 %507
      %509 = vrot.lane.b32.xlu0 %v418, 4
      %v510 = vpop.permute.xlu0 %509
      %511 = vrot.lane.b32.xlu0 %v419, 4
      %v512 = vpop.permute.xlu0 %511
      %513 = vrot.lane.b32.xlu0 %v420, 4
      %v514 = vpop.permute.xlu0 %513
      %515 = vrot.lane.b32.xlu0 %v421, 4
      %v516 = vpop.permute.xlu0 %515
      %517 = vrot.lane.b32.xlu0 %v422, 4
      %v518 = vpop.permute.xlu0 %517
      %vm551 = vcmask 64544
      %552 = vst.msk [vmem:[#allocation2] sm:$0xff] %vm551, %v456
      %553 = vst.msk [vmem:[#allocation2 + $0x8] sm:$0xff] %vm551, %v458
      %554 = vst.msk [vmem:[#allocation2 + $0x10] sm:$0xff] %vm551, %v460
      %555 = vst.msk [vmem:[#allocation2 + $0x18] sm:$0xff] %vm551, %v462
      %556 = vst.msk [vmem:[#allocation2 + $0x20] sm:$0xff] %vm551, %v464
      %557 = vst.msk [vmem:[#allocation2 + $0x28] sm:$0xff] %vm551, %v466
      %558 = vst.msk [vmem:[#allocation2 + $0x30] sm:$0xff] %vm551, %v468
      %559 = vst.msk [vmem:[#allocation2 + $0x38] sm:$0xff] %vm551, %v470
      %560 = vst.msk [vmem:[#allocation2 + $0x40] sm:$0xff] %vm551, %v472
      %561 = vst.msk [vmem:[#allocation2 + $0x48] sm:$0xff] %vm551, %v474
      %562 = vst.msk [vmem:[#allocation2 + $0x50] sm:$0xff] %vm551, %v476
      %563 = vst.msk [vmem:[#allocation2 + $0x58] sm:$0xff] %vm551, %v478
      %564 = vst.msk [vmem:[#allocation2 + $0x60] sm:$0xff] %vm551, %v480
      %565 = vst.msk [vmem:[#allocation2 + $0x68] sm:$0xff] %vm551, %v482
      %566 = vst.msk [vmem:[#allocation2 + $0x70] sm:$0xff] %vm551, %v484
      %567 = vst.msk [vmem:[#allocation2 + $0x78] sm:$0xff] %vm551, %v486
      %568 = vst.msk [vmem:[#allocation2 + $0x80] sm:$0xff] %vm551, %v488
      %569 = vst.msk [vmem:[#allocation2 + $0x88] sm:$0xff] %vm551, %v490
      %570 = vst.msk [vmem:[#allocation2 + $0x90] sm:$0xff] %vm551, %v492
      %571 = vst.msk [vmem:[#allocation2 + $0x98] sm:$0xff] %vm551, %v494
      %572 = vst.msk [vmem:[#allocation2 + $0xa0] sm:$0xff] %vm551, %v496
      %573 = vst.msk [vmem:[#allocation2 + $0xa8] sm:$0xff] %vm551, %v498
      %574 = vst.msk [vmem:[#allocation2 + $0xb0] sm:$0xff] %vm551, %v500
      %575 = vst.msk [vmem:[#allocation2 + $0xb8] sm:$0xff] %vm551, %v502
      %576 = vst.msk [vmem:[#allocation2 + $0xc0] sm:$0xff] %vm551, %v504
      %577 = vst.msk [vmem:[#allocation2 + $0xc8] sm:$0xff] %vm551, %v506
      %578 = vst.msk [vmem:[#allocation2 + $0xd0] sm:$0xff] %vm551, %v508
      %579 = vst.msk [vmem:[#allocation2 + $0xd8] sm:$0xff] %vm551, %v510
      %580 = vst.msk [vmem:[#allocation2 + $0xe0] sm:$0xff] %vm551, %v512
      %581 = vst.msk [vmem:[#allocation2 + $0xe8] sm:$0xff] %vm551, %v514
      %582 = vst.msk [vmem:[#allocation2 + $0xf0] sm:$0xff] %vm551, %v516
      %583 = vst.msk [vmem:[#allocation2 + $0xf8] sm:$0xff] %vm551, %v518
      %v584 = vld [vmem:[%s287 + $0x2] sm:$0xff]
      %v585 = vld [vmem:[%s287 + $0xa] sm:$0xff]
      %v586 = vld [vmem:[%s287 + $0x1a] sm:$0xff]
      %v587 = vld [vmem:[%s287 + $0x22] sm:$0xff]
      %v588 = vld [vmem:[%s287 + $0x32] sm:$0xff]
      %v589 = vld [vmem:[%s287 + $0x3a] sm:$0xff]
      %v590 = vld [vmem:[%s287 + $0x4a] sm:$0xff]
      %v591 = vld [vmem:[%s287 + $0x52] sm:$0xff]
      %v592 = vld [vmem:[%s287 + $0x62] sm:$0xff]
      %v593 = vld [vmem:[%s287 + $0x6a] sm:$0xff]
      %v594 = vld [vmem:[%s287 + $0x7a] sm:$0xff]
      %v595 = vld [vmem:[%s287 + $0x82] sm:$0xff]
      %v596 = vld [vmem:[%s287 + $0x92] sm:$0xff]
      %v597 = vld [vmem:[%s287 + $0x9a] sm:$0xff]
      %v598 = vld [vmem:[%s287 + $0xaa] sm:$0xff]
      %v599 = vld [vmem:[%s287 + $0xb2] sm:$0xff]
      %v600 = vld [vmem:[%s287 + $0xc2] sm:$0xff]
      %v601 = vld [vmem:[%s287 + $0xca] sm:$0xff]
      %v602 = vld [vmem:[%s287 + $0xda] sm:$0xff]
      %v603 = vld [vmem:[%s287 + $0xe2] sm:$0xff]
      %v604 = vld [vmem:[%s287 + $0xf2] sm:$0xff]
      %v605 = vld [vmem:[%s287 + $0xfa] sm:$0xff]
      %v606 = vld [vmem:[%s287 + $0x10a] sm:$0xff]
      %v607 = vld [vmem:[%s287 + $0x112] sm:$0xff]
      %v608 = vld [vmem:[%s287 + $0x122] sm:$0xff]
      %v609 = vld [vmem:[%s287 + $0x12a] sm:$0xff]
      %v610 = vld [vmem:[%s287 + $0x13a] sm:$0xff]
      %v611 = vld [vmem:[%s287 + $0x142] sm:$0xff]
      %v612 = vld [vmem:[%s287 + $0x152] sm:$0xff]
      %v613 = vld [vmem:[%s287 + $0x15a] sm:$0xff]
      %v614 = vld [vmem:[%s287 + $0x16a] sm:$0xff]
      %v615 = vld [vmem:[%s287 + $0x172] sm:$0xff]
      %648 = vrot.lane.b32.xlu0 %v584, 8
      %v649 = vpop.permute.xlu0 %648
      %650 = vrot.lane.b32.xlu0 %v585, 8
      %v651 = vpop.permute.xlu0 %650
      %652 = vrot.lane.b32.xlu0 %v586, 8
      %v653 = vpop.permute.xlu0 %652
      %654 = vrot.lane.b32.xlu0 %v587, 8
      %v655 = vpop.permute.xlu0 %654
      %656 = vrot.lane.b32.xlu0 %v588, 8
      %v657 = vpop.permute.xlu0 %656
      %658 = vrot.lane.b32.xlu0 %v589, 8
      %v659 = vpop.permute.xlu0 %658
      %660 = vrot.lane.b32.xlu0 %v590, 8
      %v661 = vpop.permute.xlu0 %660
      %662 = vrot.lane.b32.xlu0 %v591, 8
      %v663 = vpop.permute.xlu0 %662
      %664 = vrot.lane.b32.xlu0 %v592, 8
      %v665 = vpop.permute.xlu0 %664
      %666 = vrot.lane.b32.xlu0 %v593, 8
      %v667 = vpop.permute.xlu0 %666
      %668 = vrot.lane.b32.xlu0 %v594, 8
      %v669 = vpop.permute.xlu0 %668
      %670 = vrot.lane.b32.xlu0 %v595, 8
      %v671 = vpop.permute.xlu0 %670
      %672 = vrot.lane.b32.xlu0 %v596, 8
      %v673 = vpop.permute.xlu0 %672
      %674 = vrot.lane.b32.xlu0 %v597, 8
      %v675 = vpop.permute.xlu0 %674
      %676 = vrot.lane.b32.xlu0 %v598, 8
      %v677 = vpop.permute.xlu0 %676
      %678 = vrot.lane.b32.xlu0 %v599, 8
      %v679 = vpop.permute.xlu0 %678
      %680 = vrot.lane.b32.xlu0 %v600, 8
      %v681 = vpop.permute.xlu0 %680
      %682 = vrot.lane.b32.xlu0 %v601, 8
      %v683 = vpop.permute.xlu0 %682
      %684 = vrot.lane.b32.xlu0 %v602, 8
      %v685 = vpop.permute.xlu0 %684
      %686 = vrot.lane.b32.xlu0 %v603, 8
      %v687 = vpop.permute.xlu0 %686
      %688 = vrot.lane.b32.xlu0 %v604, 8
      %v689 = vpop.permute.xlu0 %688
      %690 = vrot.lane.b32.xlu0 %v605, 8
      %v691 = vpop.permute.xlu0 %690
      %692 = vrot.lane.b32.xlu0 %v606, 8
      %v693 = vpop.permute.xlu0 %692
      %694 = vrot.lane.b32.xlu0 %v607, 8
      %v695 = vpop.permute.xlu0 %694
      %696 = vrot.lane.b32.xlu0 %v608, 8
      %v697 = vpop.permute.xlu0 %696
      %698 = vrot.lane.b32.xlu0 %v609, 8
      %v699 = vpop.permute.xlu0 %698
      %700 = vrot.lane.b32.xlu0 %v610, 8
      %v701 = vpop.permute.xlu0 %700
      %702 = vrot.lane.b32.xlu0 %v611, 8
      %v703 = vpop.permute.xlu0 %702
      %704 = vrot.lane.b32.xlu0 %v612, 8
      %v705 = vpop.permute.xlu0 %704
      %706 = vrot.lane.b32.xlu0 %v613, 8
      %v707 = vpop.permute.xlu0 %706
      %708 = vrot.lane.b32.xlu0 %v614, 8
      %v709 = vpop.permute.xlu0 %708
      %710 = vrot.lane.b32.xlu0 %v615, 8
      %v711 = vpop.permute.xlu0 %710
      %vm744 = vcmask 97344
      %745 = vst.msk [vmem:[#allocation2] sm:$0xff] %vm744, %v649
      %746 = vst.msk [vmem:[#allocation2 + $0x8] sm:$0xff] %vm744, %v651
      %747 = vst.msk [vmem:[#allocation2 + $0x10] sm:$0xff] %vm744, %v653
      %748 = vst.msk [vmem:[#allocation2 + $0x18] sm:$0xff] %vm744, %v655
      %749 = vst.msk [vmem:[#allocation2 + $0x20] sm:$0xff] %vm744, %v657
      %750 = vst.msk [vmem:[#allocation2 + $0x28] sm:$0xff] %vm744, %v659
      %751 = vst.msk [vmem:[#allocation2 + $0x30] sm:$0xff] %vm744, %v661
      %752 = vst.msk [vmem:[#allocation2 + $0x38] sm:$0xff] %vm744, %v663
      %753 = vst.msk [vmem:[#allocation2 + $0x40] sm:$0xff] %vm744, %v665
      %754 = vst.msk [vmem:[#allocation2 + $0x48] sm:$0xff] %vm744, %v667
      %755 = vst.msk [vmem:[#allocation2 + $0x50] sm:$0xff] %vm744, %v669
      %756 = vst.msk [vmem:[#allocation2 + $0x58] sm:$0xff] %vm744, %v671
      %757 = vst.msk [vmem:[#allocation2 + $0x60] sm:$0xff] %vm744, %v673
      %758 = vst.msk [vmem:[#allocation2 + $0x68] sm:$0xff] %vm744, %v675
      %759 = vst.msk [vmem:[#allocation2 + $0x70] sm:$0xff] %vm744, %v677
      %760 = vst.msk [vmem:[#allocation2 + $0x78] sm:$0xff] %vm744, %v679
      %761 = vst.msk [vmem:[#allocation2 + $0x80] sm:$0xff] %vm744, %v681
      %762 = vst.msk [vmem:[#allocation2 + $0x88] sm:$0xff] %vm744, %v683
      %763 = vst.msk [vmem:[#allocation2 + $0x90] sm:$0xff] %vm744, %v685
      %764 = vst.msk [vmem:[#allocation2 + $0x98] sm:$0xff] %vm744, %v687
      %765 = vst.msk [vmem:[#allocation2 + $0xa0] sm:$0xff] %vm744, %v689
      %766 = vst.msk [vmem:[#allocation2 + $0xa8] sm:$0xff] %vm744, %v691
      %767 = vst.msk [vmem:[#allocation2 + $0xb0] sm:$0xff] %vm744, %v693
      %768 = vst.msk [vmem:[#allocation2 + $0xb8] sm:$0xff] %vm744, %v695
      %769 = vst.msk [vmem:[#allocation2 + $0xc0] sm:$0xff] %vm744, %v697
      %770 = vst.msk [vmem:[#allocation2 + $0xc8] sm:$0xff] %vm744, %v699
      %771 = vst.msk [vmem:[#allocation2 + $0xd0] sm:$0xff] %vm744, %v701
      %772 = vst.msk [vmem:[#allocation2 + $0xd8] sm:$0xff] %vm744, %v703
      %773 = vst.msk [vmem:[#allocation2 + $0xe0] sm:$0xff] %vm744, %v705
      %774 = vst.msk [vmem:[#allocation2 + $0xe8] sm:$0xff] %vm744, %v707
      %775 = vst.msk [vmem:[#allocation2 + $0xf0] sm:$0xff] %vm744, %v709
      %776 = vst.msk [vmem:[#allocation2 + $0xf8] sm:$0xff] %vm744, %v711
      %s777 = scalar_lea.vmem %s287, 24
      %v778 = vld [vmem:[%s777] sm:$0xff]
      %v779 = vld [vmem:[%s777 + $0x8] sm:$0xff]
      %v780 = vld [vmem:[%s777 + $0x18] sm:$0xff]
      %v781 = vld [vmem:[%s777 + $0x20] sm:$0xff]
      %v782 = vld [vmem:[%s777 + $0x30] sm:$0xff]
      %v783 = vld [vmem:[%s777 + $0x38] sm:$0xff]
      %v784 = vld [vmem:[%s777 + $0x48] sm:$0xff]
      %v785 = vld [vmem:[%s777 + $0x50] sm:$0xff]
      %v786 = vld [vmem:[%s777 + $0x60] sm:$0xff]
      %v787 = vld [vmem:[%s777 + $0x68] sm:$0xff]
      %v788 = vld [vmem:[%s777 + $0x78] sm:$0xff]
      %v789 = vld [vmem:[%s777 + $0x80] sm:$0xff]
      %v790 = vld [vmem:[%s777 + $0x90] sm:$0xff]
      %v791 = vld [vmem:[%s777 + $0x98] sm:$0xff]
      %v792 = vld [vmem:[%s777 + $0xa8] sm:$0xff]
      %v793 = vld [vmem:[%s777 + $0xb0] sm:$0xff]
      %v794 = vld [vmem:[%s777 + $0xc0] sm:$0xff]
      %v795 = vld [vmem:[%s777 + $0xc8] sm:$0xff]
      %v796 = vld [vmem:[%s777 + $0xd8] sm:$0xff]
      %v797 = vld [vmem:[%s777 + $0xe0] sm:$0xff]
      %v798 = vld [vmem:[%s777 + $0xf0] sm:$0xff]
      %v799 = vld [vmem:[%s777 + $0xf8] sm:$0xff]
      %v800 = vld [vmem:[%s777 + $0x108] sm:$0xff]
      %v801 = vld [vmem:[%s777 + $0x110] sm:$0xff]
      %v802 = vld [vmem:[%s777 + $0x120] sm:$0xff]
      %v803 = vld [vmem:[%s777 + $0x128] sm:$0xff]
      %v804 = vld [vmem:[%s777 + $0x138] sm:$0xff]
      %v805 = vld [vmem:[%s777 + $0x140] sm:$0xff]
      %v806 = vld [vmem:[%s777 + $0x150] sm:$0xff]
      %v807 = vld [vmem:[%s777 + $0x158] sm:$0xff]
      %838 = vrot.lane.b32.xlu0 %v778, 12
      %v839 = vpop.permute.xlu0 %838
      %840 = vrot.lane.b32.xlu0 %v779, 12
      %v841 = vpop.permute.xlu0 %840
      %842 = vrot.lane.b32.xlu0 %v780, 12
      %v843 = vpop.permute.xlu0 %842
      %844 = vrot.lane.b32.xlu0 %v781, 12
      %v845 = vpop.permute.xlu0 %844
      %846 = vrot.lane.b32.xlu0 %v782, 12
      %v847 = vpop.permute.xlu0 %846
      %848 = vrot.lane.b32.xlu0 %v783, 12
      %v849 = vpop.permute.xlu0 %848
      %850 = vrot.lane.b32.xlu0 %v784, 12
      %v851 = vpop.permute.xlu0 %850
      %852 = vrot.lane.b32.xlu0 %v785, 12
      %v853 = vpop.permute.xlu0 %852
      %854 = vrot.lane.b32.xlu0 %v786, 12
      %v855 = vpop.permute.xlu0 %854
      %856 = vrot.lane.b32.xlu0 %v787, 12
      %v857 = vpop.permute.xlu0 %856
      %858 = vrot.lane.b32.xlu0 %v788, 12
      %v859 = vpop.permute.xlu0 %858
      %860 = vrot.lane.b32.xlu0 %v789, 12
      %v861 = vpop.permute.xlu0 %860
      %862 = vrot.lane.b32.xlu0 %v790, 12
      %v863 = vpop.permute.xlu0 %862
      %864 = vrot.lane.b32.xlu0 %v791, 12
      %v865 = vpop.permute.xlu0 %864
      %866 = vrot.lane.b32.xlu0 %v792, 12
      %v867 = vpop.permute.xlu0 %866
      %868 = vrot.lane.b32.xlu0 %v793, 12
      %v869 = vpop.permute.xlu0 %868
      %870 = vrot.lane.b32.xlu0 %v794, 12
      %v871 = vpop.permute.xlu0 %870
      %872 = vrot.lane.b32.xlu0 %v795, 12
      %v873 = vpop.permute.xlu0 %872
      %874 = vrot.lane.b32.xlu0 %v796, 12
      %v875 = vpop.permute.xlu0 %874
      %876 = vrot.lane.b32.xlu0 %v797, 12
      %v877 = vpop.permute.xlu0 %876
      %878 = vrot.lane.b32.xlu0 %v798, 12
      %v879 = vpop.permute.xlu0 %878
      %880 = vrot.lane.b32.xlu0 %v799, 12
      %v881 = vpop.permute.xlu0 %880
      %882 = vrot.lane.b32.xlu0 %v800, 12
      %v883 = vpop.permute.xlu0 %882
      %884 = vrot.lane.b32.xlu0 %v801, 12
      %v885 = vpop.permute.xlu0 %884
      %886 = vrot.lane.b32.xlu0 %v802, 12
      %v887 = vpop.permute.xlu0 %886
      %888 = vrot.lane.b32.xlu0 %v803, 12
      %v889 = vpop.permute.xlu0 %888
      %890 = vrot.lane.b32.xlu0 %v804, 12
      %v891 = vpop.permute.xlu0 %890
      %892 = vrot.lane.b32.xlu0 %v805, 12
      %v893 = vpop.permute.xlu0 %892
      %894 = vrot.lane.b32.xlu0 %v806, 12
      %v895 = vpop.permute.xlu0 %894
      %896 = vrot.lane.b32.xlu0 %v807, 12
      %v897 = vpop.permute.xlu0 %896
      %vm928 = vcmask 130144
      %929 = vst.msk [vmem:[#allocation2] sm:$0xff] %vm928, %v839
      %930 = vst.msk [vmem:[#allocation2 + $0x8] sm:$0xff] %vm928, %v841
      %931 = vst.msk [vmem:[#allocation2 + $0x10] sm:$0xff] %vm928, %v843
      %932 = vst.msk [vmem:[#allocation2 + $0x18] sm:$0xff] %vm928, %v845
      %933 = vst.msk [vmem:[#allocation2 + $0x20] sm:$0xff] %vm928, %v847
      %934 = vst.msk [vmem:[#allocation2 + $0x28] sm:$0xff] %vm928, %v849
      %935 = vst.msk [vmem:[#allocation2 + $0x30] sm:$0xff] %vm928, %v851
      %936 = vst.msk [vmem:[#allocation2 + $0x38] sm:$0xff] %vm928, %v853
      %937 = vst.msk [vmem:[#allocation2 + $0x40] sm:$0xff] %vm928, %v855
      %938 = vst.msk [vmem:[#allocation2 + $0x48] sm:$0xff] %vm928, %v857
      %939 = vst.msk [vmem:[#allocation2 + $0x50] sm:$0xff] %vm928, %v859
      %940 = vst.msk [vmem:[#allocation2 + $0x58] sm:$0xff] %vm928, %v861
      %941 = vst.msk [vmem:[#allocation2 + $0x60] sm:$0xff] %vm928, %v863
      %942 = vst.msk [vmem:[#allocation2 + $0x68] sm:$0xff] %vm928, %v865
      %943 = vst.msk [vmem:[#allocation2 + $0x70] sm:$0xff] %vm928, %v867
      %944 = vst.msk [vmem:[#allocation2 + $0x78] sm:$0xff] %vm928, %v869
      %945 = vst.msk [vmem:[#allocation2 + $0x80] sm:$0xff] %vm928, %v871
      %946 = vst.msk [vmem:[#allocation2 + $0x88] sm:$0xff] %vm928, %v873
      %947 = vst.msk [vmem:[#allocation2 + $0x90] sm:$0xff] %vm928, %v875
      %948 = vst.msk [vmem:[#allocation2 + $0x98] sm:$0xff] %vm928, %v877
      %949 = vst.msk [vmem:[#allocation2 + $0xa0] sm:$0xff] %vm928, %v879
      %950 = vst.msk [vmem:[#allocation2 + $0xa8] sm:$0xff] %vm928, %v881
      %951 = vst.msk [vmem:[#allocation2 + $0xb0] sm:$0xff] %vm928, %v883
      %952 = vst.msk [vmem:[#allocation2 + $0xb8] sm:$0xff] %vm928, %v885
      %953 = vst.msk [vmem:[#allocation2 + $0xc0] sm:$0xff] %vm928, %v887
      %954 = vst.msk [vmem:[#allocation2 + $0xc8] sm:$0xff] %vm928, %v889
      %955 = vst.msk [vmem:[#allocation2 + $0xd0] sm:$0xff] %vm928, %v891
      %956 = vst.msk [vmem:[#allocation2 + $0xd8] sm:$0xff] %vm928, %v893
      %957 = vst.msk [vmem:[#allocation2 + $0xe0] sm:$0xff] %vm928, %v895
      %958 = vst.msk [vmem:[#allocation2 + $0xe8] sm:$0xff] %vm928, %v897
      %961 = vrot.lane.b32.xlu0 %v320, 12
      %v962 = vpop.permute.xlu0 %961
      %963 = vrot.lane.b32.xlu0 %v321, 12
      %v964 = vpop.permute.xlu0 %963
      %967 = vst.msk [vmem:[#allocation2 + $0xf0] sm:$0xff] %vm928, %v962
      %968 = vst.msk [vmem:[#allocation2 + $0xf8] sm:$0xff] %vm928, %v964
      %v969 = vld [vmem:[%s777 + $0x1] sm:$0xff]
      %v970 = vld [vmem:[%s777 + $0x9] sm:$0xff]
      %v971 = vld [vmem:[%s777 + $0x19] sm:$0xff]
      %v972 = vld [vmem:[%s777 + $0x21] sm:$0xff]
      %v973 = vld [vmem:[%s777 + $0x31] sm:$0xff]
      %v974 = vld [vmem:[%s777 + $0x39] sm:$0xff]
      %v975 = vld [vmem:[%s777 + $0x49] sm:$0xff]
      %v976 = vld [vmem:[%s777 + $0x51] sm:$0xff]
      %v977 = vld [vmem:[%s777 + $0x61] sm:$0xff]
      %v978 = vld [vmem:[%s777 + $0x69] sm:$0xff]
      %v979 = vld [vmem:[%s777 + $0x79] sm:$0xff]
      %v980 = vld [vmem:[%s777 + $0x81] sm:$0xff]
      %v981 = vld [vmem:[%s777 + $0x91] sm:$0xff]
      %v982 = vld [vmem:[%s777 + $0x99] sm:$0xff]
      %v983 = vld [vmem:[%s777 + $0xa9] sm:$0xff]
      %v984 = vld [vmem:[%s777 + $0xb1] sm:$0xff]
      %v985 = vld [vmem:[%s777 + $0xc1] sm:$0xff]
      %v986 = vld [vmem:[%s777 + $0xc9] sm:$0xff]
      %v987 = vld [vmem:[%s777 + $0xd9] sm:$0xff]
      %v988 = vld [vmem:[%s777 + $0xe1] sm:$0xff]
      %v989 = vld [vmem:[%s777 + $0xf1] sm:$0xff]
      %v990 = vld [vmem:[%s777 + $0xf9] sm:$0xff]
      %v991 = vld [vmem:[%s777 + $0x109] sm:$0xff]
      %v992 = vld [vmem:[%s777 + $0x111] sm:$0xff]
      %v993 = vld [vmem:[%s777 + $0x121] sm:$0xff]
      %v994 = vld [vmem:[%s777 + $0x129] sm:$0xff]
      %v995 = vld [vmem:[%s777 + $0x139] sm:$0xff]
      %v996 = vld [vmem:[%s777 + $0x141] sm:$0xff]
      %v997 = vld [vmem:[%s777 + $0x151] sm:$0xff]
      %v998 = vld [vmem:[%s777 + $0x159] sm:$0xff]
      %1029 = vrot.lane.b32.xlu0 %v969, 16
      %v1030 = vpop.permute.xlu0 %1029
      %1031 = vrot.lane.b32.xlu0 %v970, 16
      %v1032 = vpop.permute.xlu0 %1031
      %1033 = vrot.lane.b32.xlu0 %v971, 16
      %v1034 = vpop.permute.xlu0 %1033
      %1035 = vrot.lane.b32.xlu0 %v972, 16
      %v1036 = vpop.permute.xlu0 %1035
      %1037 = vrot.lane.b32.xlu0 %v973, 16
      %v1038 = vpop.permute.xlu0 %1037
      %1039 = vrot.lane.b32.xlu0 %v974, 16
      %v1040 = vpop.permute.xlu0 %1039
      %1041 = vrot.lane.b32.xlu0 %v975, 16
      %v1042 = vpop.permute.xlu0 %1041
      %1043 = vrot.lane.b32.xlu0 %v976, 16
      %v1044 = vpop.permute.xlu0 %1043
      %1045 = vrot.lane.b32.xlu0 %v977, 16
      %v1046 = vpop.permute.xlu0 %1045
      %1047 = vrot.lane.b32.xlu0 %v978, 16
      %v1048 = vpop.permute.xlu0 %1047
      %1049 = vrot.lane.b32.xlu0 %v979, 16
      %v1050 = vpop.permute.xlu0 %1049
      %1051 = vrot.lane.b32.xlu0 %v980, 16
      %v1052 = vpop.permute.xlu0 %1051
      %1053 = vrot.lane.b32.xlu0 %v981, 16
      %v1054 = vpop.permute.xlu0 %1053
      %1055 = vrot.lane.b32.xlu0 %v982, 16
      %v1056 = vpop.permute.xlu0 %1055
      %1057 = vrot.lane.b32.xlu0 %v983, 16
      %v1058 = vpop.permute.xlu0 %1057
      %1059 = vrot.lane.b32.xlu0 %v984, 16
      %v1060 = vpop.permute.xlu0 %1059
      %1061 = vrot.lane.b32.xlu0 %v985, 16
      %v1062 = vpop.permute.xlu0 %1061
      %1063 = vrot.lane.b32.xlu0 %v986, 16
      %v1064 = vpop.permute.xlu0 %1063
      %1065 = vrot.lane.b32.xlu0 %v987, 16
      %v1066 = vpop.permute.xlu0 %1065
      %1067 = vrot.lane.b32.xlu0 %v988, 16
      %v1068 = vpop.permute.xlu0 %1067
      %1069 = vrot.lane.b32.xlu0 %v989, 16
      %v1070 = vpop.permute.xlu0 %1069
      %1071 = vrot.lane.b32.xlu0 %v990, 16
      %v1072 = vpop.permute.xlu0 %1071
      %1073 = vrot.lane.b32.xlu0 %v991, 16
      %v1074 = vpop.permute.xlu0 %1073
      %1075 = vrot.lane.b32.xlu0 %v992, 16
      %v1076 = vpop.permute.xlu0 %1075
      %1077 = vrot.lane.b32.xlu0 %v993, 16
      %v1078 = vpop.permute.xlu0 %1077
      %1079 = vrot.lane.b32.xlu0 %v994, 16
      %v1080 = vpop.permute.xlu0 %1079
      %1081 = vrot.lane.b32.xlu0 %v995, 16
      %v1082 = vpop.permute.xlu0 %1081
      %1083 = vrot.lane.b32.xlu0 %v996, 16
      %v1084 = vpop.permute.xlu0 %1083
      %1085 = vrot.lane.b32.xlu0 %v997, 16
      %v1086 = vpop.permute.xlu0 %1085
      %1087 = vrot.lane.b32.xlu0 %v998, 16
      %v1088 = vpop.permute.xlu0 %1087
      %vm1119 = vcmask 162944
      %1120 = vst.msk [vmem:[#allocation2] sm:$0xff] %vm1119, %v1030
      %1121 = vst.msk [vmem:[#allocation2 + $0x8] sm:$0xff] %vm1119, %v1032
      %1122 = vst.msk [vmem:[#allocation2 + $0x10] sm:$0xff] %vm1119, %v1034
      %1123 = vst.msk [vmem:[#allocation2 + $0x18] sm:$0xff] %vm1119, %v1036
      %1124 = vst.msk [vmem:[#allocation2 + $0x20] sm:$0xff] %vm1119, %v1038
      %1125 = vst.msk [vmem:[#allocation2 + $0x28] sm:$0xff] %vm1119, %v1040
      %1126 = vst.msk [vmem:[#allocation2 + $0x30] sm:$0xff] %vm1119, %v1042
      %1127 = vst.msk [vmem:[#allocation2 + $0x38] sm:$0xff] %vm1119, %v1044
      %1128 = vst.msk [vmem:[#allocation2 + $0x40] sm:$0xff] %vm1119, %v1046
      %1129 = vst.msk [vmem:[#allocation2 + $0x48] sm:$0xff] %vm1119, %v1048
      %1130 = vst.msk [vmem:[#allocation2 + $0x50] sm:$0xff] %vm1119, %v1050
      %1131 = vst.msk [vmem:[#allocation2 + $0x58] sm:$0xff] %vm1119, %v1052
      %1132 = vst.msk [vmem:[#allocation2 + $0x60] sm:$0xff] %vm1119, %v1054
      %1133 = vst.msk [vmem:[#allocation2 + $0x68] sm:$0xff] %vm1119, %v1056
      %1134 = vst.msk [vmem:[#allocation2 + $0x70] sm:$0xff] %vm1119, %v1058
      %1135 = vst.msk [vmem:[#allocation2 + $0x78] sm:$0xff] %vm1119, %v1060
      %1136 = vst.msk [vmem:[#allocation2 + $0x80] sm:$0xff] %vm1119, %v1062
      %1137 = vst.msk [vmem:[#allocation2 + $0x88] sm:$0xff] %vm1119, %v1064
      %1138 = vst.msk [vmem:[#allocation2 + $0x90] sm:$0xff] %vm1119, %v1066
      %1139 = vst.msk [vmem:[#allocation2 + $0x98] sm:$0xff] %vm1119, %v1068
      %1140 = vst.msk [vmem:[#allocation2 + $0xa0] sm:$0xff] %vm1119, %v1070
      %1141 = vst.msk [vmem:[#allocation2 + $0xa8] sm:$0xff] %vm1119, %v1072
      %1142 = vst.msk [vmem:[#allocation2 + $0xb0] sm:$0xff] %vm1119, %v1074
      %1143 = vst.msk [vmem:[#allocation2 + $0xb8] sm:$0xff] %vm1119, %v1076
      %1144 = vst.msk [vmem:[#allocation2 + $0xc0] sm:$0xff] %vm1119, %v1078
      %1145 = vst.msk [vmem:[#allocation2 + $0xc8] sm:$0xff] %vm1119, %v1080
      %1146 = vst.msk [vmem:[#allocation2 + $0xd0] sm:$0xff] %vm1119, %v1082
      %1147 = vst.msk [vmem:[#allocation2 + $0xd8] sm:$0xff] %vm1119, %v1084
      %1148 = vst.msk [vmem:[#allocation2 + $0xe0] sm:$0xff] %vm1119, %v1086
      %1149 = vst.msk [vmem:[#allocation2 + $0xe8] sm:$0xff] %vm1119, %v1088
      %1151 = vrot.lane.b32.xlu0 %v320, 16
      %v1152 = vpop.permute.xlu0 %1151
      %1153 = vrot.lane.b32.xlu0 %v321, 16
      %v1154 = vpop.permute.xlu0 %1153
      %1155 = vrot.lane.b32.xlu0 %v322, 16
      %v1156 = vpop.permute.xlu0 %1155
      %vm1160 = vcmask 162945
      %1161 = vst.msk [vmem:[#allocation2 + $0xef] sm:$0xfe] %vm1160, %v1152
      %1162 = vst.msk [vmem:[#allocation2 + $0xf7] sm:$0xff] %vm1119, %v1154
      %vm1163 = vcmask 155776
      %1164 = vst.msk [vmem:[#allocation2 + $0xff] sm:$0x1] %vm1163, %v1156
      %v1165 = vld [vmem:[%s777 + $0x2] sm:$0xff]
      %v1166 = vld [vmem:[%s777 + $0xa] sm:$0xff]
      %v1167 = vld [vmem:[%s777 + $0x1a] sm:$0xff]
      %v1168 = vld [vmem:[%s777 + $0x22] sm:$0xff]
      %v1169 = vld [vmem:[%s777 + $0x32] sm:$0xff]
      %v1170 = vld [vmem:[%s777 + $0x3a] sm:$0xff]
      %v1171 = vld [vmem:[%s777 + $0x4a] sm:$0xff]
      %v1172 = vld [vmem:[%s777 + $0x52] sm:$0xff]
      %v1173 = vld [vmem:[%s777 + $0x62] sm:$0xff]
      %v1174 = vld [vmem:[%s777 + $0x6a] sm:$0xff]
      %v1175 = vld [vmem:[%s777 + $0x7a] sm:$0xff]
      %v1176 = vld [vmem:[%s777 + $0x82] sm:$0xff]
      %v1177 = vld [vmem:[%s777 + $0x92] sm:$0xff]
      %v1178 = vld [vmem:[%s777 + $0x9a] sm:$0xff]
      %v1179 = vld [vmem:[%s777 + $0xaa] sm:$0xff]
      %v1180 = vld [vmem:[%s777 + $0xb2] sm:$0xff]
      %v1181 = vld [vmem:[%s777 + $0xc2] sm:$0xff]
      %v1182 = vld [vmem:[%s777 + $0xca] sm:$0xff]
      %v1183 = vld [vmem:[%s777 + $0xda] sm:$0xff]
      %v1184 = vld [vmem:[%s777 + $0xe2] sm:$0xff]
      %v1185 = vld [vmem:[%s777 + $0xf2] sm:$0xff]
      %v1186 = vld [vmem:[%s777 + $0xfa] sm:$0xff]
      %v1187 = vld [vmem:[%s777 + $0x10a] sm:$0xff]
      %v1188 = vld [vmem:[%s777 + $0x112] sm:$0xff]
      %v1189 = vld [vmem:[%s777 + $0x122] sm:$0xff]
      %v1190 = vld [vmem:[%s777 + $0x12a] sm:$0xff]
      %v1191 = vld [vmem:[%s777 + $0x13a] sm:$0xff]
      %v1192 = vld [vmem:[%s777 + $0x142] sm:$0xff]
      %v1193 = vld [vmem:[%s777 + $0x152] sm:$0xff]
      %v1194 = vld [vmem:[%s777 + $0x15a] sm:$0xff]
      %1225 = vrot.lane.b32.xlu0 %v1165, 20
      %v1226 = vpop.permute.xlu0 %1225
      %1227 = vrot.lane.b32.xlu0 %v1166, 20
      %v1228 = vpop.permute.xlu0 %1227
      %1229 = vrot.lane.b32.xlu0 %v1167, 20
      %v1230 = vpop.permute.xlu0 %1229
      %1231 = vrot.lane.b32.xlu0 %v1168, 20
      %v1232 = vpop.permute.xlu0 %1231
      %1233 = vrot.lane.b32.xlu0 %v1169, 20
      %v1234 = vpop.permute.xlu0 %1233
      %1235 = vrot.lane.b32.xlu0 %v1170, 20
      %v1236 = vpop.permute.xlu0 %1235
      %1237 = vrot.lane.b32.xlu0 %v1171, 20
      %v1238 = vpop.permute.xlu0 %1237
      %1239 = vrot.lane.b32.xlu0 %v1172, 20
      %v1240 = vpop.permute.xlu0 %1239
      %1241 = vrot.lane.b32.xlu0 %v1173, 20
      %v1242 = vpop.permute.xlu0 %1241
      %1243 = vrot.lane.b32.xlu0 %v1174, 20
      %v1244 = vpop.permute.xlu0 %1243
      %1245 = vrot.lane.b32.xlu0 %v1175, 20
      %v1246 = vpop.permute.xlu0 %1245
      %1247 = vrot.lane.b32.xlu0 %v1176, 20
      %v1248 = vpop.permute.xlu0 %1247
      %1249 = vrot.lane.b32.xlu0 %v1177, 20
      %v1250 = vpop.permute.xlu0 %1249
      %1251 = vrot.lane.b32.xlu0 %v1178, 20
      %v1252 = vpop.permute.xlu0 %1251
      %1253 = vrot.lane.b32.xlu0 %v1179, 20
      %v1254 = vpop.permute.xlu0 %1253
      %1255 = vrot.lane.b32.xlu0 %v1180, 20
      %v1256 = vpop.permute.xlu0 %1255
      %1257 = vrot.lane.b32.xlu0 %v1181, 20
      %v1258 = vpop.permute.xlu0 %1257
      %1259 = vrot.lane.b32.xlu0 %v1182, 20
      %v1260 = vpop.permute.xlu0 %1259
      %1261 = vrot.lane.b32.xlu0 %v1183, 20
      %v1262 = vpop.permute.xlu0 %1261
      %1263 = vrot.lane.b32.xlu0 %v1184, 20
      %v1264 = vpop.permute.xlu0 %1263
      %1265 = vrot.lane.b32.xlu0 %v1185, 20
      %v1266 = vpop.permute.xlu0 %1265
      %1267 = vrot.lane.b32.xlu0 %v1186, 20
      %v1268 = vpop.permute.xlu0 %1267
      %1269 = vrot.lane.b32.xlu0 %v1187, 20
      %v1270 = vpop.permute.xlu0 %1269
      %1271 = vrot.lane.b32.xlu0 %v1188, 20
      %v1272 = vpop.permute.xlu0 %1271
      %1273 = vrot.lane.b32.xlu0 %v1189, 20
      %v1274 = vpop.permute.xlu0 %1273
      %1275 = vrot.lane.b32.xlu0 %v1190, 20
      %v1276 = vpop.permute.xlu0 %1275
      %1277 = vrot.lane.b32.xlu0 %v1191, 20
      %v1278 = vpop.permute.xlu0 %1277
      %1279 = vrot.lane.b32.xlu0 %v1192, 20
      %v1280 = vpop.permute.xlu0 %1279
      %1281 = vrot.lane.b32.xlu0 %v1193, 20
      %v1282 = vpop.permute.xlu0 %1281
      %1283 = vrot.lane.b32.xlu0 %v1194, 20
      %v1284 = vpop.permute.xlu0 %1283
      %vm1315 = vcmask 195744
      %1316 = vst.msk [vmem:[#allocation2] sm:$0xff] %vm1315, %v1226
      %1317 = vst.msk [vmem:[#allocation2 + $0x8] sm:$0xff] %vm1315, %v1228
      %1318 = vst.msk [vmem:[#allocation2 + $0x10] sm:$0xff] %vm1315, %v1230
      %1319 = vst.msk [vmem:[#allocation2 + $0x18] sm:$0xff] %vm1315, %v1232
      %1320 = vst.msk [vmem:[#allocation2 + $0x20] sm:$0xff] %vm1315, %v1234
      %1321 = vst.msk [vmem:[#allocation2 + $0x28] sm:$0xff] %vm1315, %v1236
      %1322 = vst.msk [vmem:[#allocation2 + $0x30] sm:$0xff] %vm1315, %v1238
      %1323 = vst.msk [vmem:[#allocation2 + $0x38] sm:$0xff] %vm1315, %v1240
      %1324 = vst.msk [vmem:[#allocation2 + $0x40] sm:$0xff] %vm1315, %v1242
      %1325 = vst.msk [vmem:[#allocation2 + $0x48] sm:$0xff] %vm1315, %v1244
      %1326 = vst.msk [vmem:[#allocation2 + $0x50] sm:$0xff] %vm1315, %v1246
      %1327 = vst.msk [vmem:[#allocation2 + $0x58] sm:$0xff] %vm1315, %v1248
      %1328 = vst.msk [vmem:[#allocation2 + $0x60] sm:$0xff] %vm1315, %v1250
      %1329 = vst.msk [vmem:[#allocation2 + $0x68] sm:$0xff] %vm1315, %v1252
      %1330 = vst.msk [vmem:[#allocation2 + $0x70] sm:$0xff] %vm1315, %v1254
      %1331 = vst.msk [vmem:[#allocation2 + $0x78] sm:$0xff] %vm1315, %v1256
      %1332 = vst.msk [vmem:[#allocation2 + $0x80] sm:$0xff] %vm1315, %v1258
      %1333 = vst.msk [vmem:[#allocation2 + $0x88] sm:$0xff] %vm1315, %v1260
      %1334 = vst.msk [vmem:[#allocation2 + $0x90] sm:$0xff] %vm1315, %v1262
      %1335 = vst.msk [vmem:[#allocation2 + $0x98] sm:$0xff] %vm1315, %v1264
      %1336 = vst.msk [vmem:[#allocation2 + $0xa0] sm:$0xff] %vm1315, %v1266
      %1337 = vst.msk [vmem:[#allocation2 + $0xa8] sm:$0xff] %vm1315, %v1268
      %1338 = vst.msk [vmem:[#allocation2 + $0xb0] sm:$0xff] %vm1315, %v1270
      %1339 = vst.msk [vmem:[#allocation2 + $0xb8] sm:$0xff] %vm1315, %v1272
      %1340 = vst.msk [vmem:[#allocation2 + $0xc0] sm:$0xff] %vm1315, %v1274
      %1341 = vst.msk [vmem:[#allocation2 + $0xc8] sm:$0xff] %vm1315, %v1276
      %1342 = vst.msk [vmem:[#allocation2 + $0xd0] sm:$0xff] %vm1315, %v1278
      %1343 = vst.msk [vmem:[#allocation2 + $0xd8] sm:$0xff] %vm1315, %v1280
      %1344 = vst.msk [vmem:[#allocation2 + $0xe0] sm:$0xff] %vm1315, %v1282
      %1345 = vst.msk [vmem:[#allocation2 + $0xe8] sm:$0xff] %vm1315, %v1284
      %1346 = vrot.lane.b32.xlu0 %v320, 20
      %v1347 = vpop.permute.xlu0 %1346
      %1348 = vrot.lane.b32.xlu0 %v321, 20
      %v1349 = vpop.permute.xlu0 %1348
      %1350 = vrot.lane.b32.xlu0 %v322, 20
      %v1351 = vpop.permute.xlu0 %1350
      %vm1355 = vcmask 195746
      %1356 = vst.msk [vmem:[#allocation2 + $0xee] sm:$0xfc] %vm1355, %v1347
      %1357 = vst.msk [vmem:[#allocation2 + $0xf6] sm:$0xff] %vm1315, %v1349
      %vm1358 = vcmask 189600
      %1359 = vst.msk [vmem:[#allocation2 + $0xfe] sm:$0x3] %vm1358, %v1351
      %s1360 = scalar_lea.vmem %s287, 48
      %v1361 = vld [vmem:[%s1360] sm:$0xff]
      %v1362 = vld [vmem:[%s1360 + $0x8] sm:$0xff]
      %v1363 = vld [vmem:[%s1360 + $0x18] sm:$0xff]
      %v1364 = vld [vmem:[%s1360 + $0x20] sm:$0xff]
      %v1365 = vld [vmem:[%s1360 + $0x30] sm:$0xff]
      %v1366 = vld [vmem:[%s1360 + $0x38] sm:$0xff]
      %v1367 = vld [vmem:[%s1360 + $0x48] sm:$0xff]
      %v1368 = vld [vmem:[%s1360 + $0x50] sm:$0xff]
      %v1369 = vld [vmem:[%s1360 + $0x60] sm:$0xff]
      %v1370 = vld [vmem:[%s1360 + $0x68] sm:$0xff]
      %v1371 = vld [vmem:[%s1360 + $0x78] sm:$0xff]
      %v1372 = vld [vmem:[%s1360 + $0x80] sm:$0xff]
      %v1373 = vld [vmem:[%s1360 + $0x90] sm:$0xff]
      %v1374 = vld [vmem:[%s1360 + $0x98] sm:$0xff]
      %v1375 = vld [vmem:[%s1360 + $0xa8] sm:$0xff]
      %v1376 = vld [vmem:[%s1360 + $0xb0] sm:$0xff]
      %v1377 = vld [vmem:[%s1360 + $0xc0] sm:$0xff]
      %v1378 = vld [vmem:[%s1360 + $0xc8] sm:$0xff]
      %v1379 = vld [vmem:[%s1360 + $0xd8] sm:$0xff]
      %v1380 = vld [vmem:[%s1360 + $0xe0] sm:$0xff]
      %v1381 = vld [vmem:[%s1360 + $0xf0] sm:$0xff]
      %v1382 = vld [vmem:[%s1360 + $0xf8] sm:$0xff]
      %v1383 = vld [vmem:[%s1360 + $0x108] sm:$0xff]
      %v1384 = vld [vmem:[%s1360 + $0x110] sm:$0xff]
      %v1385 = vld [vmem:[%s1360 + $0x120] sm:$0xff]
      %v1386 = vld [vmem:[%s1360 + $0x128] sm:$0xff]
      %v1387 = vld [vmem:[%s1360 + $0x138] sm:$0xff]
      %v1388 = vld [vmem:[%s1360 + $0x140] sm:$0xff]
      %1417 = vrot.lane.b32.xlu0 %v1361, 24
      %v1418 = vpop.permute.xlu0 %1417
      %1419 = vrot.lane.b32.xlu0 %v1362, 24
      %v1420 = vpop.permute.xlu0 %1419
      %1421 = vrot.lane.b32.xlu0 %v1363, 24
      %v1422 = vpop.permute.xlu0 %1421
      %1423 = vrot.lane.b32.xlu0 %v1364, 24
      %v1424 = vpop.permute.xlu0 %1423
      %1425 = vrot.lane.b32.xlu0 %v1365, 24
      %v1426 = vpop.permute.xlu0 %1425
      %1427 = vrot.lane.b32.xlu0 %v1366, 24
      %v1428 = vpop.permute.xlu0 %1427
      %1429 = vrot.lane.b32.xlu0 %v1367, 24
      %v1430 = vpop.permute.xlu0 %1429
      %1431 = vrot.lane.b32.xlu0 %v1368, 24
      %v1432 = vpop.permute.xlu0 %1431
      %1433 = vrot.lane.b32.xlu0 %v1369, 24
      %v1434 = vpop.permute.xlu0 %1433
      %1435 = vrot.lane.b32.xlu0 %v1370, 24
      %v1436 = vpop.permute.xlu0 %1435
      %1437 = vrot.lane.b32.xlu0 %v1371, 24
      %v1438 = vpop.permute.xlu0 %1437
      %1439 = vrot.lane.b32.xlu0 %v1372, 24
      %v1440 = vpop.permute.xlu0 %1439
      %1441 = vrot.lane.b32.xlu0 %v1373, 24
      %v1442 = vpop.permute.xlu0 %1441
      %1443 = vrot.lane.b32.xlu0 %v1374, 24
      %v1444 = vpop.permute.xlu0 %1443
      %1445 = vrot.lane.b32.xlu0 %v1375, 24
      %v1446 = vpop.permute.xlu0 %1445
      %1447 = vrot.lane.b32.xlu0 %v1376, 24
      %v1448 = vpop.permute.xlu0 %1447
      %1449 = vrot.lane.b32.xlu0 %v1377, 24
      %v1450 = vpop.permute.xlu0 %1449
      %1451 = vrot.lane.b32.xlu0 %v1378, 24
      %v1452 = vpop.permute.xlu0 %1451
      %1453 = vrot.lane.b32.xlu0 %v1379, 24
      %v1454 = vpop.permute.xlu0 %1453
      %1455 = vrot.lane.b32.xlu0 %v1380, 24
      %v1456 = vpop.permute.xlu0 %1455
      %1457 = vrot.lane.b32.xlu0 %v1381, 24
      %v1458 = vpop.permute.xlu0 %1457
      %1459 = vrot.lane.b32.xlu0 %v1382, 24
      %v1460 = vpop.permute.xlu0 %1459
      %1461 = vrot.lane.b32.xlu0 %v1383, 24
      %v1462 = vpop.permute.xlu0 %1461
      %1463 = vrot.lane.b32.xlu0 %v1384, 24
      %v1464 = vpop.permute.xlu0 %1463
      %1465 = vrot.lane.b32.xlu0 %v1385, 24
      %v1466 = vpop.permute.xlu0 %1465
      %1467 = vrot.lane.b32.xlu0 %v1386, 24
      %v1468 = vpop.permute.xlu0 %1467
      %1469 = vrot.lane.b32.xlu0 %v1387, 24
      %v1470 = vpop.permute.xlu0 %1469
      %1471 = vrot.lane.b32.xlu0 %v1388, 24
      %v1472 = vpop.permute.xlu0 %1471
      %vm1501 = vcmask 228544
      %1502 = vst.msk [vmem:[#allocation2] sm:$0xff] %vm1501, %v1418
      %1503 = vst.msk [vmem:[#allocation2 + $0x8] sm:$0xff] %vm1501, %v1420
      %1504 = vst.msk [vmem:[#allocation2 + $0x10] sm:$0xff] %vm1501, %v1422
      %1505 = vst.msk [vmem:[#allocation2 + $0x18] sm:$0xff] %vm1501, %v1424
      %1506 = vst.msk [vmem:[#allocation2 + $0x20] sm:$0xff] %vm1501, %v1426
      %1507 = vst.msk [vmem:[#allocation2 + $0x28] sm:$0xff] %vm1501, %v1428
      %1508 = vst.msk [vmem:[#allocation2 + $0x30] sm:$0xff] %vm1501, %v1430
      %1509 = vst.msk [vmem:[#allocation2 + $0x38] sm:$0xff] %vm1501, %v1432
      %1510 = vst.msk [vmem:[#allocation2 + $0x40] sm:$0xff] %vm1501, %v1434
      %1511 = vst.msk [vmem:[#allocation2 + $0x48] sm:$0xff] %vm1501, %v1436
      %1512 = vst.msk [vmem:[#allocation2 + $0x50] sm:$0xff] %vm1501, %v1438
      %1513 = vst.msk [vmem:[#allocation2 + $0x58] sm:$0xff] %vm1501, %v1440
      %1514 = vst.msk [vmem:[#allocation2 + $0x60] sm:$0xff] %vm1501, %v1442
      %1515 = vst.msk [vmem:[#allocation2 + $0x68] sm:$0xff] %vm1501, %v1444
      %1516 = vst.msk [vmem:[#allocation2 + $0x70] sm:$0xff] %vm1501, %v1446
      %1517 = vst.msk [vmem:[#allocation2 + $0x78] sm:$0xff] %vm1501, %v1448
      %1518 = vst.msk [vmem:[#allocation2 + $0x80] sm:$0xff] %vm1501, %v1450
      %1519 = vst.msk [vmem:[#allocation2 + $0x88] sm:$0xff] %vm1501, %v1452
      %1520 = vst.msk [vmem:[#allocation2 + $0x90] sm:$0xff] %vm1501, %v1454
      %1521 = vst.msk [vmem:[#allocation2 + $0x98] sm:$0xff] %vm1501, %v1456
      %1522 = vst.msk [vmem:[#allocation2 + $0xa0] sm:$0xff] %vm1501, %v1458
      %1523 = vst.msk [vmem:[#allocation2 + $0xa8] sm:$0xff] %vm1501, %v1460
      %1524 = vst.msk [vmem:[#allocation2 + $0xb0] sm:$0xff] %vm1501, %v1462
      %1525 = vst.msk [vmem:[#allocation2 + $0xb8] sm:$0xff] %vm1501, %v1464
      %1526 = vst.msk [vmem:[#allocation2 + $0xc0] sm:$0xff] %vm1501, %v1466
      %1527 = vst.msk [vmem:[#allocation2 + $0xc8] sm:$0xff] %vm1501, %v1468
      %1528 = vst.msk [vmem:[#allocation2 + $0xd0] sm:$0xff] %vm1501, %v1470
      %1529 = vst.msk [vmem:[#allocation2 + $0xd8] sm:$0xff] %vm1501, %v1472
      %1532 = vrot.lane.b32.xlu0 %v320, 24
      %v1533 = vpop.permute.xlu0 %1532
      %1534 = vrot.lane.b32.xlu0 %v321, 24
      %v1535 = vpop.permute.xlu0 %1534
      %1536 = vrot.lane.b32.xlu0 %v323, 24
      %v1537 = vpop.permute.xlu0 %1536
      %1538 = vrot.lane.b32.xlu0 %v324, 24
      %v1539 = vpop.permute.xlu0 %1538
      %1544 = vst.msk [vmem:[#allocation2 + $0xe0] sm:$0xff] %vm1501, %v1533
      %1545 = vst.msk [vmem:[#allocation2 + $0xe8] sm:$0xff] %vm1501, %v1535
      %1546 = vst.msk [vmem:[#allocation2 + $0xf0] sm:$0xff] %vm1501, %v1537
      %1547 = vst.msk [vmem:[#allocation2 + $0xf8] sm:$0xff] %vm1501, %v1539
      %v1548 = vld [vmem:[%s1360 + $0x1] sm:$0xff]
      %v1549 = vld [vmem:[%s1360 + $0x9] sm:$0xff]
      %v1550 = vld [vmem:[%s1360 + $0x19] sm:$0xff]
      %v1551 = vld [vmem:[%s1360 + $0x21] sm:$0xff]
      %v1552 = vld [vmem:[%s1360 + $0x31] sm:$0xff]
      %v1553 = vld [vmem:[%s1360 + $0x39] sm:$0xff]
      %v1554 = vld [vmem:[%s1360 + $0x49] sm:$0xff]
      %v1555 = vld [vmem:[%s1360 + $0x51] sm:$0xff]
      %v1556 = vld [vmem:[%s1360 + $0x61] sm:$0xff]
      %v1557 = vld [vmem:[%s1360 + $0x69] sm:$0xff]
      %v1558 = vld [vmem:[%s1360 + $0x79] sm:$0xff]
      %v1559 = vld [vmem:[%s1360 + $0x81] sm:$0xff]
      %v1560 = vld [vmem:[%s1360 + $0x91] sm:$0xff]
      %v1561 = vld [vmem:[%s1360 + $0x99] sm:$0xff]
      %v1562 = vld [vmem:[%s1360 + $0xa9] sm:$0xff]
      %v1563 = vld [vmem:[%s1360 + $0xb1] sm:$0xff]
      %v1564 = vld [vmem:[%s1360 + $0xc1] sm:$0xff]
      %v1565 = vld [vmem:[%s1360 + $0xc9] sm:$0xff]
      %v1566 = vld [vmem:[%s1360 + $0xd9] sm:$0xff]
      %v1567 = vld [vmem:[%s1360 + $0xe1] sm:$0xff]
      %v1568 = vld [vmem:[%s1360 + $0xf1] sm:$0xff]
      %v1569 = vld [vmem:[%s1360 + $0xf9] sm:$0xff]
      %v1570 = vld [vmem:[%s1360 + $0x109] sm:$0xff]
      %v1571 = vld [vmem:[%s1360 + $0x111] sm:$0xff]
      %v1572 = vld [vmem:[%s1360 + $0x121] sm:$0xff]
      %v1573 = vld [vmem:[%s1360 + $0x129] sm:$0xff]
      %v1574 = vld [vmem:[%s1360 + $0x139] sm:$0xff]
      %v1575 = vld [vmem:[%s1360 + $0x141] sm:$0xff]
      %1604 = vrot.lane.b32.xlu0 %v1548, 28
      %v1605 = vpop.permute.xlu0 %1604
      %1606 = vrot.lane.b32.xlu0 %v1549, 28
      %v1607 = vpop.permute.xlu0 %1606
      %1608 = vrot.lane.b32.xlu0 %v1550, 28
      %v1609 = vpop.permute.xlu0 %1608
      %1610 = vrot.lane.b32.xlu0 %v1551, 28
      %v1611 = vpop.permute.xlu0 %1610
      %1612 = vrot.lane.b32.xlu0 %v1552, 28
      %v1613 = vpop.permute.xlu0 %1612
      %1614 = vrot.lane.b32.xlu0 %v1553, 28
      %v1615 = vpop.permute.xlu0 %1614
      %1616 = vrot.lane.b32.xlu0 %v1554, 28
      %v1617 = vpop.permute.xlu0 %1616
      %1618 = vrot.lane.b32.xlu0 %v1555, 28
      %v1619 = vpop.permute.xlu0 %1618
      %1620 = vrot.lane.b32.xlu0 %v1556, 28
      %v1621 = vpop.permute.xlu0 %1620
      %1622 = vrot.lane.b32.xlu0 %v1557, 28
      %v1623 = vpop.permute.xlu0 %1622
      %1624 = vrot.lane.b32.xlu0 %v1558, 28
      %v1625 = vpop.permute.xlu0 %1624
      %1626 = vrot.lane.b32.xlu0 %v1559, 28
      %v1627 = vpop.permute.xlu0 %1626
      %1628 = vrot.lane.b32.xlu0 %v1560, 28
      %v1629 = vpop.permute.xlu0 %1628
      %1630 = vrot.lane.b32.xlu0 %v1561, 28
      %v1631 = vpop.permute.xlu0 %1630
      %1632 = vrot.lane.b32.xlu0 %v1562, 28
      %v1633 = vpop.permute.xlu0 %1632
      %1634 = vrot.lane.b32.xlu0 %v1563, 28
      %v1635 = vpop.permute.xlu0 %1634
      %1636 = vrot.lane.b32.xlu0 %v1564, 28
      %v1637 = vpop.permute.xlu0 %1636
      %1638 = vrot.lane.b32.xlu0 %v1565, 28
      %v1639 = vpop.permute.xlu0 %1638
      %1640 = vrot.lane.b32.xlu0 %v1566, 28
      %v1641 = vpop.permute.xlu0 %1640
      %1642 = vrot.lane.b32.xlu0 %v1567, 28
      %v1643 = vpop.permute.xlu0 %1642
      %1644 = vrot.lane.b32.xlu0 %v1568, 28
      %v1645 = vpop.permute.xlu0 %1644
      %1646 = vrot.lane.b32.xlu0 %v1569, 28
      %v1647 = vpop.permute.xlu0 %1646
      %1648 = vrot.lane.b32.xlu0 %v1570, 28
      %v1649 = vpop.permute.xlu0 %1648
      %1650 = vrot.lane.b32.xlu0 %v1571, 28
      %v1651 = vpop.permute.xlu0 %1650
      %1652 = vrot.lane.b32.xlu0 %v1572, 28
      %v1653 = vpop.permute.xlu0 %1652
      %1654 = vrot.lane.b32.xlu0 %v1573, 28
      %v1655 = vpop.permute.xlu0 %1654
      %1656 = vrot.lane.b32.xlu0 %v1574, 28
      %v1657 = vpop.permute.xlu0 %1656
      %1658 = vrot.lane.b32.xlu0 %v1575, 28
      %v1659 = vpop.permute.xlu0 %1658
      %vm1688 = vcmask 261344
      %1689 = vst.msk [vmem:[#allocation2] sm:$0xff] %vm1688, %v1605
      %1690 = vst.msk [vmem:[#allocation2 + $0x8] sm:$0xff] %vm1688, %v1607
      %1691 = vst.msk [vmem:[#allocation2 + $0x10] sm:$0xff] %vm1688, %v1609
      %1692 = vst.msk [vmem:[#allocation2 + $0x18] sm:$0xff] %vm1688, %v1611
      %1693 = vst.msk [vmem:[#allocation2 + $0x20] sm:$0xff] %vm1688, %v1613
      %1694 = vst.msk [vmem:[#allocation2 + $0x28] sm:$0xff] %vm1688, %v1615
      %1695 = vst.msk [vmem:[#allocation2 + $0x30] sm:$0xff] %vm1688, %v1617
      %1696 = vst.msk [vmem:[#allocation2 + $0x38] sm:$0xff] %vm1688, %v1619
      %1697 = vst.msk [vmem:[#allocation2 + $0x40] sm:$0xff] %vm1688, %v1621
      %1698 = vst.msk [vmem:[#allocation2 + $0x48] sm:$0xff] %vm1688, %v1623
      %1699 = vst.msk [vmem:[#allocation2 + $0x50] sm:$0xff] %vm1688, %v1625
      %1700 = vst.msk [vmem:[#allocation2 + $0x58] sm:$0xff] %vm1688, %v1627
      %1701 = vst.msk [vmem:[#allocation2 + $0x60] sm:$0xff] %vm1688, %v1629
      %1702 = vst.msk [vmem:[#allocation2 + $0x68] sm:$0xff] %vm1688, %v1631
      %1703 = vst.msk [vmem:[#allocation2 + $0x70] sm:$0xff] %vm1688, %v1633
      %1704 = vst.msk [vmem:[#allocation2 + $0x78] sm:$0xff] %vm1688, %v1635
      %1705 = vst.msk [vmem:[#allocation2 + $0x80] sm:$0xff] %vm1688, %v1637
      %1706 = vst.msk [vmem:[#allocation2 + $0x88] sm:$0xff] %vm1688, %v1639
      %1707 = vst.msk [vmem:[#allocation2 + $0x90] sm:$0xff] %vm1688, %v1641
      %1708 = vst.msk [vmem:[#allocation2 + $0x98] sm:$0xff] %vm1688, %v1643
      %1709 = vst.msk [vmem:[#allocation2 + $0xa0] sm:$0xff] %vm1688, %v1645
      %1710 = vst.msk [vmem:[#allocation2 + $0xa8] sm:$0xff] %vm1688, %v1647
      %1711 = vst.msk [vmem:[#allocation2 + $0xb0] sm:$0xff] %vm1688, %v1649
      %1712 = vst.msk [vmem:[#allocation2 + $0xb8] sm:$0xff] %vm1688, %v1651
      %1713 = vst.msk [vmem:[#allocation2 + $0xc0] sm:$0xff] %vm1688, %v1653
      %1714 = vst.msk [vmem:[#allocation2 + $0xc8] sm:$0xff] %vm1688, %v1655
      %1715 = vst.msk [vmem:[#allocation2 + $0xd0] sm:$0xff] %vm1688, %v1657
      %1716 = vst.msk [vmem:[#allocation2 + $0xd8] sm:$0xff] %vm1688, %v1659
      %vm1718 = vcmask 1046528
      %v1719 = vrot.slane %v320, 1
      %v1720 = vrot.slane %v321, 1
      %v1721 = vsel %vm1718, %v1719, %v1720
      %v1722 = vrot.slane %v322, 1
      %v1723 = vsel %vm1718, %v1720, %v1722
      %v1724 = vrot.slane %v323, 1
      %v1725 = vrot.slane %v324, 1
      %v1726 = vsel %vm1718, %v1724, %v1725
      %v1727 = vrot.slane %v325, 1
      %v1728 = vsel %vm1718, %v1725, %v1727
      %1729 = vrot.lane.b32.xlu0 %v1721, 28
      %v1730 = vpop.permute.xlu0 %1729
      %1731 = vrot.lane.b32.xlu0 %v1723, 28
      %v1732 = vpop.permute.xlu0 %1731
      %1733 = vrot.lane.b32.xlu0 %v1726, 28
      %v1734 = vpop.permute.xlu0 %1733
      %1735 = vrot.lane.b32.xlu0 %v1728, 28
      %v1736 = vpop.permute.xlu0 %1735
      %1741 = vst.msk [vmem:[#allocation2 + $0xe0] sm:$0xff] %vm1688, %v1730
      %1742 = vst.msk [vmem:[#allocation2 + $0xe8] sm:$0xff] %vm1688, %v1732
      %1743 = vst.msk [vmem:[#allocation2 + $0xf0] sm:$0xff] %vm1688, %v1734
      %1744 = vst.msk [vmem:[#allocation2 + $0xf8] sm:$0xff] %vm1688, %v1736
      %v1745 = vld [vmem:[%s1360 + $0x2] sm:$0xff]
      %v1746 = vld [vmem:[%s1360 + $0xa] sm:$0xff]
      %v1747 = vld [vmem:[%s1360 + $0x1a] sm:$0xff]
      %v1748 = vld [vmem:[%s1360 + $0x22] sm:$0xff]
      %v1749 = vld [vmem:[%s1360 + $0x32] sm:$0xff]
      %v1750 = vld [vmem:[%s1360 + $0x3a] sm:$0xff]
      %v1751 = vld [vmem:[%s1360 + $0x4a] sm:$0xff]
      %v1752 = vld [vmem:[%s1360 + $0x52] sm:$0xff]
      %v1753 = vld [vmem:[%s1360 + $0x62] sm:$0xff]
      %v1754 = vld [vmem:[%s1360 + $0x6a] sm:$0xff]
      %v1755 = vld [vmem:[%s1360 + $0x7a] sm:$0xff]
      %v1756 = vld [vmem:[%s1360 + $0x82] sm:$0xff]
      %v1757 = vld [vmem:[%s1360 + $0x92] sm:$0xff]
      %v1758 = vld [vmem:[%s1360 + $0x9a] sm:$0xff]
      %v1759 = vld [vmem:[%s1360 + $0xaa] sm:$0xff]
      %v1760 = vld [vmem:[%s1360 + $0xb2] sm:$0xff]
      %v1761 = vld [vmem:[%s1360 + $0xc2] sm:$0xff]
      %v1762 = vld [vmem:[%s1360 + $0xca] sm:$0xff]
      %v1763 = vld [vmem:[%s1360 + $0xda] sm:$0xff]
      %v1764 = vld [vmem:[%s1360 + $0xe2] sm:$0xff]
      %v1765 = vld [vmem:[%s1360 + $0xf2] sm:$0xff]
      %v1766 = vld [vmem:[%s1360 + $0xfa] sm:$0xff]
      %v1767 = vld [vmem:[%s1360 + $0x10a] sm:$0xff]
      %v1768 = vld [vmem:[%s1360 + $0x112] sm:$0xff]
      %v1769 = vld [vmem:[%s1360 + $0x122] sm:$0xff]
      %v1770 = vld [vmem:[%s1360 + $0x12a] sm:$0xff]
      %v1771 = vld [vmem:[%s1360 + $0x13a] sm:$0xff]
      %v1772 = vld [vmem:[%s1360 + $0x142] sm:$0xff]
      %1801 = vrot.lane.b32.xlu0 %v1745, 32
      %v1802 = vpop.permute.xlu0 %1801
      %1803 = vrot.lane.b32.xlu0 %v1746, 32
      %v1804 = vpop.permute.xlu0 %1803
      %1805 = vrot.lane.b32.xlu0 %v1747, 32
      %v1806 = vpop.permute.xlu0 %1805
      %1807 = vrot.lane.b32.xlu0 %v1748, 32
      %v1808 = vpop.permute.xlu0 %1807
      %1809 = vrot.lane.b32.xlu0 %v1749, 32
      %v1810 = vpop.permute.xlu0 %1809
      %1811 = vrot.lane.b32.xlu0 %v1750, 32
      %v1812 = vpop.permute.xlu0 %1811
      %1813 = vrot.lane.b32.xlu0 %v1751, 32
      %v1814 = vpop.permute.xlu0 %1813
      %1815 = vrot.lane.b32.xlu0 %v1752, 32
      %v1816 = vpop.permute.xlu0 %1815
      %1817 = vrot.lane.b32.xlu0 %v1753, 32
      %v1818 = vpop.permute.xlu0 %1817
      %1819 = vrot.lane.b32.xlu0 %v1754, 32
      %v1820 = vpop.permute.xlu0 %1819
      %1821 = vrot.lane.b32.xlu0 %v1755, 32
      %v1822 = vpop.permute.xlu0 %1821
      %1823 = vrot.lane.b32.xlu0 %v1756, 32
      %v1824 = vpop.permute.xlu0 %1823
      %1825 = vrot.lane.b32.xlu0 %v1757, 32
      %v1826 = vpop.permute.xlu0 %1825
      %1827 = vrot.lane.b32.xlu0 %v1758, 32
      %v1828 = vpop.permute.xlu0 %1827
      %1829 = vrot.lane.b32.xlu0 %v1759, 32
      %v1830 = vpop.permute.xlu0 %1829
      %1831 = vrot.lane.b32.xlu0 %v1760, 32
      %v1832 = vpop.permute.xlu0 %1831
      %1833 = vrot.lane.b32.xlu0 %v1761, 32
      %v1834 = vpop.permute.xlu0 %1833
      %1835 = vrot.lane.b32.xlu0 %v1762, 32
      %v1836 = vpop.permute.xlu0 %1835
      %1837 = vrot.lane.b32.xlu0 %v1763, 32
      %v1838 = vpop.permute.xlu0 %1837
      %1839 = vrot.lane.b32.xlu0 %v1764, 32
      %v1840 = vpop.permute.xlu0 %1839
      %1841 = vrot.lane.b32.xlu0 %v1765, 32
      %v1842 = vpop.permute.xlu0 %1841
      %1843 = vrot.lane.b32.xlu0 %v1766, 32
      %v1844 = vpop.permute.xlu0 %1843
      %1845 = vrot.lane.b32.xlu0 %v1767, 32
      %v1846 = vpop.permute.xlu0 %1845
      %1847 = vrot.lane.b32.xlu0 %v1768, 32
      %v1848 = vpop.permute.xlu0 %1847
      %1849 = vrot.lane.b32.xlu0 %v1769, 32
      %v1850 = vpop.permute.xlu0 %1849
      %1851 = vrot.lane.b32.xlu0 %v1770, 32
      %v1852 = vpop.permute.xlu0 %1851
      %1853 = vrot.lane.b32.xlu0 %v1771, 32
      %v1854 = vpop.permute.xlu0 %1853
      %1855 = vrot.lane.b32.xlu0 %v1772, 32
      %v1856 = vpop.permute.xlu0 %1855
      %vm1885 = vcmask 294144
      %1886 = vst.msk [vmem:[#allocation2] sm:$0xff] %vm1885, %v1802
      %1887 = vst.msk [vmem:[#allocation2 + $0x8] sm:$0xff] %vm1885, %v1804
      %1888 = vst.msk [vmem:[#allocation2 + $0x10] sm:$0xff] %vm1885, %v1806
      %1889 = vst.msk [vmem:[#allocation2 + $0x18] sm:$0xff] %vm1885, %v1808
      %1890 = vst.msk [vmem:[#allocation2 + $0x20] sm:$0xff] %vm1885, %v1810
      %1891 = vst.msk [vmem:[#allocation2 + $0x28] sm:$0xff] %vm1885, %v1812
      %1892 = vst.msk [vmem:[#allocation2 + $0x30] sm:$0xff] %vm1885, %v1814
      %1893 = vst.msk [vmem:[#allocation2 + $0x38] sm:$0xff] %vm1885, %v1816
      %1894 = vst.msk [vmem:[#allocation2 + $0x40] sm:$0xff] %vm1885, %v1818
      %1895 = vst.msk [vmem:[#allocation2 + $0x48] sm:$0xff] %vm1885, %v1820
      %1896 = vst.msk [vmem:[#allocation2 + $0x50] sm:$0xff] %vm1885, %v1822
      %1897 = vst.msk [vmem:[#allocation2 + $0x58] sm:$0xff] %vm1885, %v1824
      %1898 = vst.msk [vmem:[#allocation2 + $0x60] sm:$0xff] %vm1885, %v1826
      %1899 = vst.msk [vmem:[#allocation2 + $0x68] sm:$0xff] %vm1885, %v1828
      %1900 = vst.msk [vmem:[#allocation2 + $0x70] sm:$0xff] %vm1885, %v1830
      %1901 = vst.msk [vmem:[#allocation2 + $0x78] sm:$0xff] %vm1885, %v1832
      %1902 = vst.msk [vmem:[#allocation2 + $0x80] sm:$0xff] %vm1885, %v1834
      %1903 = vst.msk [vmem:[#allocation2 + $0x88] sm:$0xff] %vm1885, %v1836
      %1904 = vst.msk [vmem:[#allocation2 + $0x90] sm:$0xff] %vm1885, %v1838
      %1905 = vst.msk [vmem:[#allocation2 + $0x98] sm:$0xff] %vm1885, %v1840
      %1906 = vst.msk [vmem:[#allocation2 + $0xa0] sm:$0xff] %vm1885, %v1842
      %1907 = vst.msk [vmem:[#allocation2 + $0xa8] sm:$0xff] %vm1885, %v1844
      %1908 = vst.msk [vmem:[#allocation2 + $0xb0] sm:$0xff] %vm1885, %v1846
      %1909 = vst.msk [vmem:[#allocation2 + $0xb8] sm:$0xff] %vm1885, %v1848
      %1910 = vst.msk [vmem:[#allocation2 + $0xc0] sm:$0xff] %vm1885, %v1850
      %1911 = vst.msk [vmem:[#allocation2 + $0xc8] sm:$0xff] %vm1885, %v1852
      %1912 = vst.msk [vmem:[#allocation2 + $0xd0] sm:$0xff] %vm1885, %v1854
      %1913 = vst.msk [vmem:[#allocation2 + $0xd8] sm:$0xff] %vm1885, %v1856
      %vm1914 = vcmask 1045504
      %v1915 = vrot.slane %v320, 2
      %v1916 = vrot.slane %v321, 2
      %v1917 = vsel %vm1914, %v1915, %v1916
      %v1918 = vrot.slane %v322, 2
      %v1919 = vsel %vm1914, %v1916, %v1918
      %v1920 = vrot.slane %v323, 2
      %v1921 = vrot.slane %v324, 2
      %v1922 = vsel %vm1914, %v1920, %v1921
      %v1923 = vrot.slane %v325, 2
      %v1924 = vsel %vm1914, %v1921, %v1923
      %1925 = vrot.lane.b32.xlu0 %v1917, 32
      %v1926 = vpop.permute.xlu0 %1925
      %1927 = vrot.lane.b32.xlu0 %v1919, 32
      %v1928 = vpop.permute.xlu0 %1927
      %1929 = vrot.lane.b32.xlu0 %v1922, 32
      %v1930 = vpop.permute.xlu0 %1929
      %1931 = vrot.lane.b32.xlu0 %v1924, 32
      %v1932 = vpop.permute.xlu0 %1931
      %1937 = vst.msk [vmem:[#allocation2 + $0xe0] sm:$0xff] %vm1885, %v1926
      %1938 = vst.msk [vmem:[#allocation2 + $0xe8] sm:$0xff] %vm1885, %v1928
      %1939 = vst.msk [vmem:[#allocation2 + $0xf0] sm:$0xff] %vm1885, %v1930
      %1940 = vst.msk [vmem:[#allocation2 + $0xf8] sm:$0xff] %vm1885, %v1932
      %v1941 = vld [vmem:[%s3] sm:$0x1]
      %v1942 = vld [vmem:[#allocation2] sm:$0xff]
      %v1943 = vld [vmem:[#allocation2 + $0x8] sm:$0xff]
      %v1944 = vld [vmem:[#allocation2 + $0x10] sm:$0xff]
      %v1945 = vld [vmem:[#allocation2 + $0x18] sm:$0xff]
      %v1946 = vld [vmem:[#allocation2 + $0x20] sm:$0xff]
      %v1947 = vld [vmem:[#allocation2 + $0x28] sm:$0xff]
      %v1948 = vld [vmem:[#allocation2 + $0x30] sm:$0xff]
      %v1949 = vld [vmem:[#allocation2 + $0x38] sm:$0xff]
      %v1950 = vld [vmem:[#allocation2 + $0x40] sm:$0xff]
      %v1951 = vld [vmem:[#allocation2 + $0x48] sm:$0xff]
      %v1952 = vld [vmem:[#allocation2 + $0x50] sm:$0xff]
      %v1953 = vld [vmem:[#allocation2 + $0x58] sm:$0xff]
      %v1954 = vld [vmem:[#allocation2 + $0x60] sm:$0xff]
      %v1955 = vld [vmem:[#allocation2 + $0x68] sm:$0xff]
      %v1956 = vld [vmem:[#allocation2 + $0x70] sm:$0xff]
      %v1957 = vld [vmem:[#allocation2 + $0x78] sm:$0xff]
      %v1958 = vld [vmem:[#allocation2 + $0x80] sm:$0xff]
      %v1959 = vld [vmem:[#allocation2 + $0x88] sm:$0xff]
      %v1960 = vld [vmem:[#allocation2 + $0x90] sm:$0xff]
      %v1961 = vld [vmem:[#allocation2 + $0x98] sm:$0xff]
      %v1962 = vld [vmem:[#allocation2 + $0xa0] sm:$0xff]
      %v1963 = vld [vmem:[#allocation2 + $0xa8] sm:$0xff]
      %v1964 = vld [vmem:[#allocation2 + $0xb0] sm:$0xff]
      %v1965 = vld [vmem:[#allocation2 + $0xb8] sm:$0xff]
      %v1966 = vld [vmem:[#allocation2 + $0xc0] sm:$0xff]
      %v1967 = vld [vmem:[#allocation2 + $0xc8] sm:$0xff]
      %v1968 = vld [vmem:[#allocation2 + $0xd0] sm:$0xff]
      %v1969 = vld [vmem:[#allocation2 + $0xd8] sm:$0xff]
      %v1970 = vld [vmem:[#allocation2 + $0xe0] sm:$0xff]
      %v1971 = vld [vmem:[#allocation2 + $0xe8] sm:$0xff]
      %v1972 = vld [vmem:[#allocation2 + $0xf0] sm:$0xff]
      %v1973 = vld [vmem:[#allocation2 + $0xf8] sm:$0xff]
      %v1974 = vld [vmem:[%s2] sm:$0xff]
      %v1975 = vld [vmem:[%s2 + $0x8] sm:$0xff]
      %v1976 = vld [vmem:[%s2 + $0x10] sm:$0xff]
      %v1977 = vld [vmem:[%s2 + $0x18] sm:$0xff]
      %v1978 = vld [vmem:[%s2 + $0x20] sm:$0xf]
      %v1980 = vlaneseq
      %v1981 = vshrl.u32 %v1980, 7
      %v1982 = vsub.s32 0, %v1981
      %v1983 = vrot.slane %v1941, %v1982
      %vm1985 = vcmask 293888
      %v1987 = vsel %vm1985, %v1942, 0
      %v1990 = vsel %vm1985, %v1943, 0
      %v1993 = vsel %vm1985, %v1944, 0
      %v1996 = vsel %vm1985, %v1945, 0
      %v1999 = vsel %vm1985, %v1946, 0
      %v2002 = vsel %vm1985, %v1947, 0
      %v2005 = vsel %vm1985, %v1948, 0
      %v2008 = vsel %vm1985, %v1949, 0
      %v2011 = vsel %vm1985, %v1950, 0
      %v2014 = vsel %vm1985, %v1951, 0
      %v2017 = vsel %vm1985, %v1952, 0
      %v2020 = vsel %vm1985, %v1953, 0
      %v2023 = vsel %vm1985, %v1954, 0
      %v2026 = vsel %vm1985, %v1955, 0
      %v2029 = vsel %vm1985, %v1956, 0
      %v2032 = vsel %vm1985, %v1957, 0
      %v2035 = vsel %vm1985, %v1958, 0
      %v2038 = vsel %vm1985, %v1959, 0
      %v2041 = vsel %vm1985, %v1960, 0
      %v2044 = vsel %vm1985, %v1961, 0
      %v2047 = vsel %vm1985, %v1962, 0
      %v2050 = vsel %vm1985, %v1963, 0
      %v2053 = vsel %vm1985, %v1964, 0
      %v2056 = vsel %vm1985, %v1965, 0
      %v2059 = vsel %vm1985, %v1966, 0
      %v2062 = vsel %vm1985, %v1967, 0
      %v2065 = vsel %vm1985, %v1968, 0
      %v2068 = vsel %vm1985, %v1969, 0
      %v2071 = vsel %vm1985, %v1970, 0
      %v2074 = vsel %vm1985, %v1971, 0
      %v2077 = vsel %vm1985, %v1972, 0
      %v2080 = vsel %vm1985, %v1973, 0
      %vm2082 = vcmask 1043456
      %v2084 = vsel %vm2082, %v1978, 0
      %2086 = vmatprep.subr.mxu0 0.0
      %2087 = vmatpush1.msra.mxu0 %v1974
      %2088 = vmatprep.subr.mxu0 0.0
      %2089 = vmatpush1.msra.mxu0 %v1975
      %2090 = vmatprep.subr.mxu0 0.0
      %2091 = vmatpush1.msra.mxu0 %v1976
      %2092 = vmatprep.subr.mxu0 0.0
      %2093 = vmatpush1.msra.mxu0 %v1977
      %2094 = vmatprep.subr.mxu0 0.0
      %2095 = vmatpush1.msra.mxu0 %v2084
      %2096 = vmatprep.subr.mxu0 0.0
      %2097 = vmatpush1.msra.mxu0 0.0
      %2098 = vmatprep.subr.mxu0 0.0
      %2099 = vmatpush1.msra.mxu0 0.0
      %2100 = vmatprep.subr.mxu0 0.0
      %2101 = vmatpush1.msra.mxu0 0.0
      %2102 = vmatprep.subr.mxu0 0.0
      %2103 = vmatpush1.msra.mxu0 0.0
      %2104 = vmatprep.subr.mxu0 0.0
      %2105 = vmatpush1.msra.mxu0 0.0
      %2106 = vmatprep.subr.mxu0 0.0
      %2107 = vmatpush1.msra.mxu0 0.0
      %2108 = vmatprep.subr.mxu0 0.0
      %2109 = vmatpush1.msra.mxu0 0.0
      %2110 = vmatprep.subr.mxu0 0.0
      %2111 = vmatpush1.msra.mxu0 0.0
      %2112 = vmatprep.subr.mxu0 0.0
      %2113 = vmatpush1.msra.mxu0 0.0
      %2114 = vmatprep.subr.mxu0 0.0
      %2115 = vmatpush1.msra.mxu0 0.0
      %2116 = vmatprep.subr.mxu0 0.0
      %2117 = vmatpush1.msra.mxu0 0.0
      %2118 = vmatprep.subr.mxu0 0.0
      %2119 = vmatpush1.msra.mxu0 0.0
      %2120 = vmatprep.subr.mxu0 0.0
      %2121 = vmatpush1.msra.mxu0 0.0
      %2122 = vmatprep.subr.mxu0 0.0
      %2123 = vmatpush1.msra.mxu0 0.0
      %2124 = vmatprep.subr.mxu0 0.0
      %2125 = vmatpush1.msra.mxu0 0.0
      %2126 = vmatprep.subr.mxu0 0.0
      %2127 = vmatpush1.msra.mxu0 0.0
      %2128 = vmatprep.subr.mxu0 0.0
      %2129 = vmatpush1.msra.mxu0 0.0
      %2130 = vmatprep.subr.mxu0 0.0
      %2131 = vmatpush1.msra.mxu0 0.0
      %2132 = vmatprep.subr.mxu0 0.0
      %2133 = vmatpush1.msra.mxu0 0.0
      %2134 = vmatprep.subr.mxu0 0.0
      %2135 = vmatpush1.msra.mxu0 0.0
      %2136 = vmatprep.subr.mxu0 0.0
      %2137 = vmatpush1.msra.mxu0 0.0
      %2138 = vmatprep.subr.mxu0 0.0
      %2139 = vmatpush1.msra.mxu0 0.0
      %2140 = vmatprep.subr.mxu0 0.0
      %2141 = vmatpush1.msra.mxu0 0.0
      %2142 = vmatprep.subr.mxu0 0.0
      %2143 = vmatpush1.msra.mxu0 0.0
      %2144 = vmatprep.subr.mxu0 0.0
      %2145 = vmatpush1.msra.mxu0 0.0
      %2146 = vmatprep.subr.mxu0 0.0
      %2147 = vmatpush1.msra.mxu0 0.0
      %2148 = vmatprep.subr.mxu0 0.0
      %2149 = vmatpush1.msra.mxu0 0.0
      %2150 = vmatprep.mubr.f32.mxu0 0.0
      %2151 = vmatmul.mubr.f32.gmra.mrb[0].mxu0 %v1987
      %v2152 = vpop.f32.mrb[0].mxu0
      %v2153 = vadd.f32 %v1983, %v2152
      %v2154 = vpop.f32.mrb[0].mxu0
      %2155 = vmatprep.mubr.f32.mxu0 0.0
      %2156 = vmatmul.mubr.f32.gmra.mrb[0].mxu0 %v1990
      %v2157 = vpop.f32.mrb[0].mxu0
      %v2158 = vadd.f32 %v1983, %v2157
      %v2159 = vpop.f32.mrb[0].mxu0
      %2160 = vmatprep.mubr.f32.mxu0 0.0
      %2161 = vmatmul.mubr.f32.gmra.mrb[0].mxu0 %v1993
      %v2162 = vpop.f32.mrb[0].mxu0
      %v2163 = vadd.f32 %v1983, %v2162
      %v2164 = vpop.f32.mrb[0].mxu0
      %2165 = vmatprep.mubr.f32.mxu0 0.0
      %2166 = vmatmul.mubr.f32.gmra.mrb[0].mxu0 %v1996
      %v2167 = vpop.f32.mrb[0].mxu0
      %v2168 = vadd.f32 %v1983, %v2167
      %v2169 = vpop.f32.mrb[0].mxu0
      %2170 = vmatprep.mubr.f32.mxu0 0.0
      %2171 = vmatmul.mubr.f32.gmra.mrb[0].mxu0 %v1999
      %v2172 = vpop.f32.mrb[0].mxu0
      %v2173 = vadd.f32 %v1983, %v2172
      %v2174 = vpop.f32.mrb[0].mxu0
      %2175 = vmatprep.mubr.f32.mxu0 0.0
      %2176 = vmatmul.mubr.f32.gmra.mrb[0].mxu0 %v2002
      %v2177 = vpop.f32.mrb[0].mxu0
      %v2178 = vadd.f32 %v1983, %v2177
      %v2179 = vpop.f32.mrb[0].mxu0
      %2180 = vmatprep.mubr.f32.mxu0 0.0
      %2181 = vmatmul.mubr.f32.gmra.mrb[0].mxu0 %v2005
      %v2182 = vpop.f32.mrb[0].mxu0
      %v2183 = vadd.f32 %v1983, %v2182
      %v2184 = vpop.f32.mrb[0].mxu0
      %2185 = vmatprep.mubr.f32.mxu0 0.0
      %2186 = vmatmul.mubr.f32.gmra.mrb[0].mxu0 %v2008
      %v2187 = vpop.f32.mrb[0].mxu0
      %v2188 = vadd.f32 %v1983, %v2187
      %v2189 = vpop.f32.mrb[0].mxu0
      %2190 = vmatprep.mubr.f32.mxu0 0.0
      %2191 = vmatmul.mubr.f32.gmra.mrb[0].mxu0 %v2011
      %v2192 = vpop.f32.mrb[0].mxu0
      %v2193 = vadd.f32 %v1983, %v2192
      %v2194 = vpop.f32.mrb[0].mxu0
      %2195 = vmatprep.mubr.f32.mxu0 0.0
      %2196 = vmatmul.mubr.f32.gmra.mrb[0].mxu0 %v2014
      %v2197 = vpop.f32.mrb[0].mxu0
      %v2198 = vadd.f32 %v1983, %v2197
      %v2199 = vpop.f32.mrb[0].mxu0
      %2200 = vmatprep.mubr.f32.mxu0 0.0
      %2201 = vmatmul.mubr.f32.gmra.mrb[0].mxu0 %v2017
      %v2202 = vpop.f32.mrb[0].mxu0
      %v2203 = vadd.f32 %v1983, %v2202
      %v2204 = vpop.f32.mrb[0].mxu0
      %2205 = vmatprep.mubr.f32.mxu0 0.0
      %2206 = vmatmul.mubr.f32.gmra.mrb[0].mxu0 %v2020
      %v2207 = vpop.f32.mrb[0].mxu0
      %v2208 = vadd.f32 %v1983, %v2207
      %v2209 = vpop.f32.mrb[0].mxu0
      %2210 = vmatprep.mubr.f32.mxu0 0.0
      %2211 = vmatmul.mubr.f32.gmra.mrb[0].mxu0 %v2023
      %v2212 = vpop.f32.mrb[0].mxu0
      %v2213 = vadd.f32 %v1983, %v2212
      %v2214 = vpop.f32.mrb[0].mxu0
      %2215 = vmatprep.mubr.f32.mxu0 0.0
      %2216 = vmatmul.mubr.f32.gmra.mrb[0].mxu0 %v2026
      %v2217 = vpop.f32.mrb[0].mxu0
      %v2218 = vadd.f32 %v1983, %v2217
      %v2219 = vpop.f32.mrb[0].mxu0
      %2220 = vmatprep.mubr.f32.mxu0 0.0
      %2221 = vmatmul.mubr.f32.gmra.mrb[0].mxu0 %v2029
      %v2222 = vpop.f32.mrb[0].mxu0
      %v2223 = vadd.f32 %v1983, %v2222
      %v2224 = vpop.f32.mrb[0].mxu0
      %2225 = vmatprep.mubr.f32.mxu0 0.0
      %2226 = vmatmul.mubr.f32.gmra.mrb[0].mxu0 %v2032
      %v2227 = vpop.f32.mrb[0].mxu0
      %v2228 = vadd.f32 %v1983, %v2227
      %v2229 = vpop.f32.mrb[0].mxu0
      %2230 = vmatprep.mubr.f32.mxu0 0.0
      %2231 = vmatmul.mubr.f32.gmra.mrb[0].mxu0 %v2035
      %v2232 = vpop.f32.mrb[0].mxu0
      %v2233 = vadd.f32 %v1983, %v2232
      %v2234 = vpop.f32.mrb[0].mxu0
      %2235 = vmatprep.mubr.f32.mxu0 0.0
      %2236 = vmatmul.mubr.f32.gmra.mrb[0].mxu0 %v2038
      %v2237 = vpop.f32.mrb[0].mxu0
      %v2238 = vadd.f32 %v1983, %v2237
      %v2239 = vpop.f32.mrb[0].mxu0
      %2240 = vmatprep.mubr.f32.mxu0 0.0
      %2241 = vmatmul.mubr.f32.gmra.mrb[0].mxu0 %v2041
      %v2242 = vpop.f32.mrb[0].mxu0
      %v2243 = vadd.f32 %v1983, %v2242
      %v2244 = vpop.f32.mrb[0].mxu0
      %2245 = vmatprep.mubr.f32.mxu0 0.0
      %2246 = vmatmul.mubr.f32.gmra.mrb[0].mxu0 %v2044
      %v2247 = vpop.f32.mrb[0].mxu0
      %v2248 = vadd.f32 %v1983, %v2247
      %v2249 = vpop.f32.mrb[0].mxu0
      %2250 = vmatprep.mubr.f32.mxu0 0.0
      %2251 = vmatmul.mubr.f32.gmra.mrb[0].mxu0 %v2047
      %v2252 = vpop.f32.mrb[0].mxu0
      %v2253 = vadd.f32 %v1983, %v2252
      %v2254 = vpop.f32.mrb[0].mxu0
      %2255 = vmatprep.mubr.f32.mxu0 0.0
      %2256 = vmatmul.mubr.f32.gmra.mrb[0].mxu0 %v2050
      %v2257 = vpop.f32.mrb[0].mxu0
      %v2258 = vadd.f32 %v1983, %v2257
      %v2259 = vpop.f32.mrb[0].mxu0
      %2260 = vmatprep.mubr.f32.mxu0 0.0
      %2261 = vmatmul.mubr.f32.gmra.mrb[0].mxu0 %v2053
      %v2262 = vpop.f32.mrb[0].mxu0
      %v2263 = vadd.f32 %v1983, %v2262
      %v2264 = vpop.f32.mrb[0].mxu0
      %2265 = vmatprep.mubr.f32.mxu0 0.0
      %2266 = vmatmul.mubr.f32.gmra.mrb[0].mxu0 %v2056
      %v2267 = vpop.f32.mrb[0].mxu0
      %v2268 = vadd.f32 %v1983, %v2267
      %v2269 = vpop.f32.mrb[0].mxu0
      %2270 = vmatprep.mubr.f32.mxu0 0.0
      %2271 = vmatmul.mubr.f32.gmra.mrb[0].mxu0 %v2059
      %v2272 = vpop.f32.mrb[0].mxu0
      %v2273 = vadd.f32 %v1983, %v2272
      %v2274 = vpop.f32.mrb[0].mxu0
      %2275 = vmatprep.mubr.f32.mxu0 0.0
      %2276 = vmatmul.mubr.f32.gmra.mrb[0].mxu0 %v2062
      %v2277 = vpop.f32.mrb[0].mxu0
      %v2278 = vadd.f32 %v1983, %v2277
      %v2279 = vpop.f32.mrb[0].mxu0
      %2280 = vmatprep.mubr.f32.mxu0 0.0
      %2281 = vmatmul.mubr.f32.gmra.mrb[0].mxu0 %v2065
      %v2282 = vpop.f32.mrb[0].mxu0
      %v2283 = vadd.f32 %v1983, %v2282
      %v2284 = vpop.f32.mrb[0].mxu0
      %2285 = vmatprep.mubr.f32.mxu0 0.0
      %2286 = vmatmul.mubr.f32.gmra.mrb[0].mxu0 %v2068
      %v2287 = vpop.f32.mrb[0].mxu0
      %v2288 = vadd.f32 %v1983, %v2287
      %v2289 = vpop.f32.mrb[0].mxu0
      %2290 = vmatprep.mubr.f32.mxu0 0.0
      %2291 = vmatmul.mubr.f32.gmra.mrb[0].mxu0 %v2071
      %v2292 = vpop.f32.mrb[0].mxu0
      %v2293 = vadd.f32 %v1983, %v2292
      %v2294 = vpop.f32.mrb[0].mxu0
      %2295 = vmatprep.mubr.f32.mxu0 0.0
      %2296 = vmatmul.mubr.f32.gmra.mrb[0].mxu0 %v2074
      %v2297 = vpop.f32.mrb[0].mxu0
      %v2298 = vadd.f32 %v1983, %v2297
      %v2299 = vpop.f32.mrb[0].mxu0
      %2300 = vmatprep.mubr.f32.mxu0 0.0
      %2301 = vmatmul.mubr.f32.gmra.mrb[0].mxu0 %v2077
      %v2302 = vpop.f32.mrb[0].mxu0
      %v2303 = vadd.f32 %v1983, %v2302
      %v2304 = vpop.f32.mrb[0].mxu0
      %2305 = vmatprep.mubr.f32.mxu0 0.0
      %2306 = vmatmul.mubr.f32.gmra.mrb[0].mxu0 %v2080
      %v2307 = vpop.f32.mrb[0].mxu0
      %v2308 = vadd.f32 %v1983, %v2307
      %v2309 = vpop.f32.mrb[0].mxu0
      %2310 = vdwg.mxu0
      %v2311 = vxor.u32 %v2153, 2147483648
      %v2312 = vxor.u32 %v2158, 2147483648
      %v2313 = vxor.u32 %v2163, 2147483648
      %v2314 = vxor.u32 %v2168, 2147483648
      %v2315 = vxor.u32 %v2173, 2147483648
      %v2316 = vxor.u32 %v2178, 2147483648
      %v2317 = vxor.u32 %v2183, 2147483648
      %v2318 = vxor.u32 %v2188, 2147483648
      %v2319 = vxor.u32 %v2193, 2147483648
      %v2320 = vxor.u32 %v2198, 2147483648
      %v2321 = vxor.u32 %v2203, 2147483648
      %v2322 = vxor.u32 %v2208, 2147483648
      %v2323 = vxor.u32 %v2213, 2147483648
      %v2324 = vxor.u32 %v2218, 2147483648
      %v2325 = vxor.u32 %v2223, 2147483648
      %v2326 = vxor.u32 %v2228, 2147483648
      %v2327 = vxor.u32 %v2233, 2147483648
      %v2328 = vxor.u32 %v2238, 2147483648
      %v2329 = vxor.u32 %v2243, 2147483648
      %v2330 = vxor.u32 %v2248, 2147483648
      %v2331 = vxor.u32 %v2253, 2147483648
      %v2332 = vxor.u32 %v2258, 2147483648
      %v2333 = vxor.u32 %v2263, 2147483648
      %v2334 = vxor.u32 %v2268, 2147483648
      %v2335 = vxor.u32 %v2273, 2147483648
      %v2336 = vxor.u32 %v2278, 2147483648
      %v2337 = vxor.u32 %v2283, 2147483648
      %v2338 = vxor.u32 %v2288, 2147483648
      %v2339 = vxor.u32 %v2293, 2147483648
      %v2340 = vxor.u32 %v2298, 2147483648
      %v2341 = vxor.u32 %v2303, 2147483648
      %v2342 = vxor.u32 %v2308, 2147483648
      %v2343 = vmul.f32 %v2311, 1.442695
      %v2344 = vpow.pop %v2343
      %v2345 = vmul.f32 %v2312, 1.442695
      %v2346 = vpow.pop %v2345
      %v2347 = vmul.f32 %v2313, 1.442695
      %v2348 = vpow.pop %v2347
      %v2349 = vmul.f32 %v2314, 1.442695
      %v2350 = vpow.pop %v2349
      %v2351 = vmul.f32 %v2315, 1.442695
      %v2352 = vpow.pop %v2351
      %v2353 = vmul.f32 %v2316, 1.442695
      %v2354 = vpow.pop %v2353
      %v2355 = vmul.f32 %v2317, 1.442695
      %v2356 = vpow.pop %v2355
      %v2357 = vmul.f32 %v2318, 1.442695
      %v2358 = vpow.pop %v2357
      %v2359 = vmul.f32 %v2319, 1.442695
      %v2360 = vpow.pop %v2359
      %v2361 = vmul.f32 %v2320, 1.442695
      %v2362 = vpow.pop %v2361
      %v2363 = vmul.f32 %v2321, 1.442695
      %v2364 = vpow.pop %v2363
      %v2365 = vmul.f32 %v2322, 1.442695
      %v2366 = vpow.pop %v2365
      %v2367 = vmul.f32 %v2323, 1.442695
      %v2368 = vpow.pop %v2367
      %v2369 = vmul.f32 %v2324, 1.442695
      %v2370 = vpow.pop %v2369
      %v2371 = vmul.f32 %v2325, 1.442695
      %v2372 = vpow.pop %v2371
      %v2373 = vmul.f32 %v2326, 1.442695
      %v2374 = vpow.pop %v2373
      %v2375 = vmul.f32 %v2327, 1.442695
      %v2376 = vpow.pop %v2375
      %v2377 = vmul.f32 %v2328, 1.442695
      %v2378 = vpow.pop %v2377
      %v2379 = vmul.f32 %v2329, 1.442695
      %v2380 = vpow.pop %v2379
      %v2381 = vmul.f32 %v2330, 1.442695
      %v2382 = vpow.pop %v2381
      %v2383 = vmul.f32 %v2331, 1.442695
      %v2384 = vpow.pop %v2383
      %v2385 = vmul.f32 %v2332, 1.442695
      %v2386 = vpow.pop %v2385
      %v2387 = vmul.f32 %v2333, 1.442695
      %v2388 = vpow.pop %v2387
      %v2389 = vmul.f32 %v2334, 1.442695
      %v2390 = vpow.pop %v2389
      %v2391 = vmul.f32 %v2335, 1.442695
      %v2392 = vpow.pop %v2391
      %v2393 = vmul.f32 %v2336, 1.442695
      %v2394 = vpow.pop %v2393
      %v2395 = vmul.f32 %v2337, 1.442695
      %v2396 = vpow.pop %v2395
      %v2397 = vmul.f32 %v2338, 1.442695
      %v2398 = vpow.pop %v2397
      %v2399 = vmul.f32 %v2339, 1.442695
      %v2400 = vpow.pop %v2399
      %v2401 = vmul.f32 %v2340, 1.442695
      %v2402 = vpow.pop %v2401
      %v2403 = vmul.f32 %v2341, 1.442695
      %v2404 = vpow.pop %v2403
      %v2405 = vmul.f32 %v2342, 1.442695
      %v2406 = vpow.pop %v2405
      %v2407 = vadd.f32 %v2344, 1.0
      %v2408 = vadd.f32 %v2346, 1.0
      %v2409 = vadd.f32 %v2348, 1.0
      %v2410 = vadd.f32 %v2350, 1.0
      %v2411 = vadd.f32 %v2352, 1.0
      %v2412 = vadd.f32 %v2354, 1.0
      %v2413 = vadd.f32 %v2356, 1.0
      %v2414 = vadd.f32 %v2358, 1.0
      %v2415 = vadd.f32 %v2360, 1.0
      %v2416 = vadd.f32 %v2362, 1.0
      %v2417 = vadd.f32 %v2364, 1.0
      %v2418 = vadd.f32 %v2366, 1.0
      %v2419 = vadd.f32 %v2368, 1.0
      %v2420 = vadd.f32 %v2370, 1.0
      %v2421 = vadd.f32 %v2372, 1.0
      %v2422 = vadd.f32 %v2374, 1.0
      %v2423 = vadd.f32 %v2376, 1.0
      %v2424 = vadd.f32 %v2378, 1.0
      %v2425 = vadd.f32 %v2380, 1.0
      %v2426 = vadd.f32 %v2382, 1.0
      %v2427 = vadd.f32 %v2384, 1.0
      %v2428 = vadd.f32 %v2386, 1.0
      %v2429 = vadd.f32 %v2388, 1.0
      %v2430 = vadd.f32 %v2390, 1.0
      %v2431 = vadd.f32 %v2392, 1.0
      %v2432 = vadd.f32 %v2394, 1.0
      %v2433 = vadd.f32 %v2396, 1.0
      %v2434 = vadd.f32 %v2398, 1.0
      %v2435 = vadd.f32 %v2400, 1.0
      %v2436 = vadd.f32 %v2402, 1.0
      %v2437 = vadd.f32 %v2404, 1.0
      %v2438 = vadd.f32 %v2406, 1.0
      %v2439 = vrcp.pop %v2407
      %v2440 = vmul.f32 1.0, %v2439
      %v2441 = vrcp.pop %v2408
      %v2442 = vmul.f32 1.0, %v2441
      %v2443 = vrcp.pop %v2409
      %v2444 = vmul.f32 1.0, %v2443
      %v2445 = vrcp.pop %v2410
      %v2446 = vmul.f32 1.0, %v2445
      %v2447 = vrcp.pop %v2411
      %v2448 = vmul.f32 1.0, %v2447
      %v2449 = vrcp.pop %v2412
      %v2450 = vmul.f32 1.0, %v2449
      %v2451 = vrcp.pop %v2413
      %v2452 = vmul.f32 1.0, %v2451
      %v2453 = vrcp.pop %v2414
      %v2454 = vmul.f32 1.0, %v2453
      %v2455 = vrcp.pop %v2415
      %v2456 = vmul.f32 1.0, %v2455
      %v2457 = vrcp.pop %v2416
      %v2458 = vmul.f32 1.0, %v2457
      %v2459 = vrcp.pop %v2417
      %v2460 = vmul.f32 1.0, %v2459
      %v2461 = vrcp.pop %v2418
      %v2462 = vmul.f32 1.0, %v2461
      %v2463 = vrcp.pop %v2419
      %v2464 = vmul.f32 1.0, %v2463
      %v2465 = vrcp.pop %v2420
      %v2466 = vmul.f32 1.0, %v2465
      %v2467 = vrcp.pop %v2421
      %v2468 = vmul.f32 1.0, %v2467
      %v2469 = vrcp.pop %v2422
      %v2470 = vmul.f32 1.0, %v2469
      %v2471 = vrcp.pop %v2423
      %v2472 = vmul.f32 1.0, %v2471
      %v2473 = vrcp.pop %v2424
      %v2474 = vmul.f32 1.0, %v2473
      %v2475 = vrcp.pop %v2425
      %v2476 = vmul.f32 1.0, %v2475
      %v2477 = vrcp.pop %v2426
      %v2478 = vmul.f32 1.0, %v2477
      %v2479 = vrcp.pop %v2427
      %v2480 = vmul.f32 1.0, %v2479
      %v2481 = vrcp.pop %v2428
      %v2482 = vmul.f32 1.0, %v2481
      %v2483 = vrcp.pop %v2429
      %v2484 = vmul.f32 1.0, %v2483
      %v2485 = vrcp.pop %v2430
      %v2486 = vmul.f32 1.0, %v2485
      %v2487 = vrcp.pop %v2431
      %v2488 = vmul.f32 1.0, %v2487
      %v2489 = vrcp.pop %v2432
      %v2490 = vmul.f32 1.0, %v2489
      %v2491 = vrcp.pop %v2433
      %v2492 = vmul.f32 1.0, %v2491
      %v2493 = vrcp.pop %v2434
      %v2494 = vmul.f32 1.0, %v2493
      %v2495 = vrcp.pop %v2435
      %v2496 = vmul.f32 1.0, %v2495
      %v2497 = vrcp.pop %v2436
      %v2498 = vmul.f32 1.0, %v2497
      %v2499 = vrcp.pop %v2437
      %v2500 = vmul.f32 1.0, %v2499
      %v2501 = vrcp.pop %v2438
      %v2502 = vmul.f32 1.0, %v2501
      %v2503 = vmul.f32 %v2153, %v2440
      %v2504 = vmul.f32 %v2158, %v2442
      %v2505 = vmul.f32 %v2163, %v2444
      %v2506 = vmul.f32 %v2168, %v2446
      %v2507 = vmul.f32 %v2173, %v2448
      %v2508 = vmul.f32 %v2178, %v2450
      %v2509 = vmul.f32 %v2183, %v2452
      %v2510 = vmul.f32 %v2188, %v2454
      %v2511 = vmul.f32 %v2193, %v2456
      %v2512 = vmul.f32 %v2198, %v2458
      %v2513 = vmul.f32 %v2203, %v2460
      %v2514 = vmul.f32 %v2208, %v2462
      %v2515 = vmul.f32 %v2213, %v2464
      %v2516 = vmul.f32 %v2218, %v2466
      %v2517 = vmul.f32 %v2223, %v2468
      %v2518 = vmul.f32 %v2228, %v2470
      %v2519 = vmul.f32 %v2233, %v2472
      %v2520 = vmul.f32 %v2238, %v2474
      %v2521 = vmul.f32 %v2243, %v2476
      %v2522 = vmul.f32 %v2248, %v2478
      %v2523 = vmul.f32 %v2253, %v2480
      %v2524 = vmul.f32 %v2258, %v2482
      %v2525 = vmul.f32 %v2263, %v2484
      %v2526 = vmul.f32 %v2268, %v2486
      %v2527 = vmul.f32 %v2273, %v2488
      %v2528 = vmul.f32 %v2278, %v2490
      %v2529 = vmul.f32 %v2283, %v2492
      %v2530 = vmul.f32 %v2288, %v2494
      %v2531 = vmul.f32 %v2293, %v2496
      %v2532 = vmul.f32 %v2298, %v2498
      %v2533 = vmul.f32 %v2303, %v2500
      %v2534 = vmul.f32 %v2308, %v2502
      %2535 = vst.msk [vmem:[%s318] sm:$0xff] %vm358, %v2503
      %2536 = vst.msk [vmem:[%s318 + $0x8] sm:$0xff] %vm358, %v2504
      %2537 = vst.msk [vmem:[%s318 + $0x10] sm:$0xff] %vm358, %v2505
      %2538 = vst.msk [vmem:[%s318 + $0x18] sm:$0xff] %vm358, %v2506
      %2539 = vst.msk [vmem:[%s318 + $0x20] sm:$0xff] %vm358, %v2507
      %2540 = vst.msk [vmem:[%s318 + $0x28] sm:$0xff] %vm358, %v2508
      %2541 = vst.msk [vmem:[%s318 + $0x30] sm:$0xff] %vm358, %v2509
      %2542 = vst.msk [vmem:[%s318 + $0x38] sm:$0xff] %vm358, %v2510
      %2543 = vst.msk [vmem:[%s318 + $0x40] sm:$0xff] %vm358, %v2511
      %2544 = vst.msk [vmem:[%s318 + $0x48] sm:$0xff] %vm358, %v2512
      %2545 = vst.msk [vmem:[%s318 + $0x50] sm:$0xff] %vm358, %v2513
      %2546 = vst.msk [vmem:[%s318 + $0x58] sm:$0xff] %vm358, %v2514
      %2547 = vst.msk [vmem:[%s318 + $0x60] sm:$0xff] %vm358, %v2515
      %2548 = vst.msk [vmem:[%s318 + $0x68] sm:$0xff] %vm358, %v2516
      %2549 = vst.msk [vmem:[%s318 + $0x70] sm:$0xff] %vm358, %v2517
      %2550 = vst.msk [vmem:[%s318 + $0x78] sm:$0xff] %vm358, %v2518
      %2551 = vst.msk [vmem:[%s318 + $0x80] sm:$0xff] %vm358, %v2519
      %2552 = vst.msk [vmem:[%s318 + $0x88] sm:$0xff] %vm358, %v2520
      %2553 = vst.msk [vmem:[%s318 + $0x90] sm:$0xff] %vm358, %v2521
      %2554 = vst.msk [vmem:[%s318 + $0x98] sm:$0xff] %vm358, %v2522
      %2555 = vst.msk [vmem:[%s318 + $0xa0] sm:$0xff] %vm358, %v2523
      %2556 = vst.msk [vmem:[%s318 + $0xa8] sm:$0xff] %vm358, %v2524
      %2557 = vst.msk [vmem:[%s318 + $0xb0] sm:$0xff] %vm358, %v2525
      %2558 = vst.msk [vmem:[%s318 + $0xb8] sm:$0xff] %vm358, %v2526
      %2559 = vst.msk [vmem:[%s318 + $0xc0] sm:$0xff] %vm358, %v2527
      %2560 = vst.msk [vmem:[%s318 + $0xc8] sm:$0xff] %vm358, %v2528
      %2561 = vst.msk [vmem:[%s318 + $0xd0] sm:$0xff] %vm358, %v2529
      %2562 = vst.msk [vmem:[%s318 + $0xd8] sm:$0xff] %vm358, %v2530
      %2563 = vst.msk [vmem:[%s318 + $0xe0] sm:$0xff] %vm358, %v2531
      %2564 = vst.msk [vmem:[%s318 + $0xe8] sm:$0xff] %vm358, %v2532
      %2565 = vst.msk [vmem:[%s318 + $0xf0] sm:$0xff] %vm358, %v2533
      %2566 = vst.msk [vmem:[%s318 + $0xf8] sm:$0xff] %vm358, %v2534
      %s2567 = smul.u32 16, %s20
      %p2568 = scmp.lt.s32.totalorder %s19, 1
      %s2569 = scalar_select %p2568, %s19, 1
      %p2570 = scmp.lt.s32.totalorder %s2567, 15
      %s2571 = scalar_select %p2570, %s2567, 15
      %s2572 = smul.addr %s2571, 2
      %s2573 = smul.addr %s2569, 32
      %s2574 = sadd.s32 %s2572, %s2573
      %s2575 = smul.addr %s2574, 8
      %s2576 = scalar_lea.vmem %s4, %s2575
      // Predicated region
      $region37: #{separable_conv_block.1} parent=35 // pred_check
        %p2577 = pneg %p149
      $region38: #{separable_conv_block.1} parent=35 // pred_check_branch
        %2579 = sbr.rel (%p2577) target = $region40
      $region39: #{separable_conv_block.1} parent=35 // pred_region
        %s2580 = smul.u32 16, %s20
      $region40: #{separable_conv_block.1} parent=35 // pred_fallthru
        _
    $region36: #{separable_conv_block.1} parent=5 // pred_fallthru
      _
    %p2581 = scmp.le.s32.totalorder 2, %s10
    // Predicated region
    $region41: #{separable_conv_block.1} parent=5 // pred_check
      %p2582 = pneg %p2581
    $region42: #{separable_conv_block.1} parent=5 // pred_check_branch
      %2584 = sbr.rel (%p2582) target = $region44
    $region43: #{separable_conv_block.1} parent=5 // pred_region
      %s2585 = ssub.s32 %s10, 2
      // Predicated region
      $region45: #{separable_conv_block.1} parent=43 // pred_check
        %p2586 = pneg %p155
      $region46: #{separable_conv_block.1} parent=43 // pred_check_branch
        %2588 = sbr.rel (%p2586) target = $region48
      $region47: #{separable_conv_block.1} parent=43 // pred_region
        %s2589 = smul.u32 16, %s22
        %p2590 = scmp.lt.s32.totalorder %s21, 1
        %s2591 = scalar_select %p2590, %s21, 1
        %p2592 = scmp.lt.s32.totalorder %s2589, 15
        %s2593 = scalar_select %p2592, %s2589, 15
        %s2594 = smul.addr %s2593, 2
        %s2595 = smul.addr %s2591, 32
        %s2596 = sadd.s32 %s2594, %s2595
        %s2597 = smul.addr %s2596, 8
        %s2598 = scalar_lea.vmem %s4, %s2597
      $region48: #{separable_conv_block.1} parent=43 // pred_fallthru
        _
    $region44: #{separable_conv_block.1} parent=5 // pred_fallthru
      _
  $region6: #{separable_conv_block.1} parent=0 // loop_footer
    %s14 = sadd.s32 1, %s10
  $region7: #{separable_conv_block.1} parent=0 // loop_footer_branch
    %9 = sbr.rel target = $region3
  $region8: #{separable_conv_block.1} parent=0 // loop_exit
    _

</llo_original>
